<compile_context>
chip_gen: v7x
topology: tpu7x:2x2x1
jax: 0.10.0
libtpu: 0.0.40
codegen_flags: <defaults>
</compile_context>

<pallas_src>
import math
import functools

import jax
import jax.numpy as jnp
from jax.experimental import pallas as pl
from jax.experimental.pallas import tpu as pltpu


def transformer_kernel(nhead, num_layers,
                       x_ref, pe_ref, w_in_ref, wqkvo_ref, w1_ref, w2_ref,
                       wm1_ref, wm2_ref, dvec_ref, ffvec_ref, bm2_ref,
                       attn_mask_ref, head_mask_ref, pool_ref, out_ref):
    f32, bf16 = jnp.float32, jnp.bfloat16
    L = num_layers

    def layer_norm(v, w, b):
        mu = jnp.mean(v, axis=-1, keepdims=True)
        var = jnp.mean((v - mu) ** 2, axis=-1, keepdims=True)
        return (v - mu) * jax.lax.rsqrt(var + 1e-5) * w + b

    # constants precomputed host-side, loaded once (hoisted out of the layer loop)
    attn_mask = attn_mask_ref[...]                 # (BS, H*BS) additive block mask, f32
    head_mask = head_mask_ref[...]                 # (H*BS, D) 0/1 head-lane mask, f32
    head_mask_bf = head_mask.astype(bf16)

    # ---- input projection + positional encoding (batch folded into M) ----------
    h = jnp.dot(x_ref[...].astype(bf16), w_in_ref[...],
                preferred_element_type=f32) + dvec_ref[0] + pe_ref[...]   # (BS, D) f32

    # ---- transformer encoder layers (post-norm) ---------------------------------
    for l in range(L):                                       # static unroll (L=2)
        r = 1 + 9 * l
        hb = h.astype(bf16)
        q = jnp.dot(hb, wqkvo_ref[4 * l + 0], preferred_element_type=f32) + dvec_ref[r + 0]
        k = jnp.dot(hb, wqkvo_ref[4 * l + 1], preferred_element_type=f32) + dvec_ref[r + 1]
        v = jnp.dot(hb, wqkvo_ref[4 * l + 2], preferred_element_type=f32) + dvec_ref[r + 2]
        # (softmax scale already folded into wq / bq at prep time)

        # fused multi-head attention: sublane-stack K/V per head with lane masking,
        # so scores / softmax / context each run once, lane-dense, on the MXU.
        kp = (jnp.concatenate([k] * nhead, axis=0) * head_mask).astype(bf16)  # (H*BS, D)
        vp = (jnp.concatenate([v] * nhead, axis=0) * head_mask).astype(bf16)  # (H*BS, D)

        s = jax.lax.dot_general(q.astype(bf16), kp, (((1,), (1,)), ((), ())),
                                preferred_element_type=f32)                   # (BS, H*BS)
        s = s + attn_mask                       # mask add stays f32 (before exp)
        s = s - jnp.max(s, axis=-1, keepdims=True)   # global row max; cancels in ratio
        p = jnp.exp(s).astype(bf16)
        ctx = jnp.dot(p, vp, preferred_element_type=f32)            # (BS, D) un-normalized
        den = jnp.dot(p, head_mask_bf, preferred_element_type=f32)  # per-head softmax denom
        mixed = ctx * pl.reciprocal(den, approx=True)

        attn = jnp.dot(mixed.astype(bf16), wqkvo_ref[4 * l + 3],
                       preferred_element_type=f32) + dvec_ref[r + 3]
        h = layer_norm(h + attn, dvec_ref[r + 5], dvec_ref[r + 6])

        ff = jnp.dot(h.astype(bf16), w1_ref[l], preferred_element_type=f32) + ffvec_ref[l]
        ff = jnp.maximum(ff, 0.0)
        ff = jnp.dot(ff.astype(bf16), w2_ref[l], preferred_element_type=f32) + dvec_ref[r + 4]
        h = layer_norm(h + ff, dvec_ref[r + 7], dvec_ref[r + 8])

    # ---- mean pool over seq (tiny matmul) + batched output MLP ------------------
    pooled = jnp.dot(pool_ref[...], h.astype(bf16), preferred_element_type=f32)   # (B, D)
    m = jnp.dot(pooled.astype(bf16), wm1_ref[...],
                preferred_element_type=f32) + ffvec_ref[L]
    m = jnp.maximum(m, 0.0)
    out_ref[...] = jnp.dot(m.astype(bf16), wm2_ref[...],
                           preferred_element_type=f32) + bm2_ref[...]              # (B, OUT)


def prepare_params(params, batch, seq_len, nhead):
    """One-time conversion of f32 master params into kernel-ready operands."""
    f32, bf16 = jnp.float32, jnp.bfloat16
    L, D, FF = params["w1"].shape[0], params["pe"].shape[-1], params["w1"].shape[-1]
    HD = D // nhead
    B, S = batch, seq_len
    BS, HBS = B * S, nhead * B * S
    scale = 1.0 / math.sqrt(HD)

    # fold the softmax scale into the q projection (identical math to q * scale)
    wq = params["wq"] * scale
    bq = params["bq"] * scale

    # packed weights: [wq, wk, wv, wo] per layer -> (L*4, D, D) bf16
    w_qkvo = jnp.stack([wq, params["wk"], params["wv"], params["wo"]],
                       axis=1).reshape(L * 4, D, D).astype(bf16)

    # packed (1, D)-width vectors: [b_in] + per-layer [bq,bk,bv,bo,b2,ln1w,ln1b,ln2w,ln2b]
    rows = [params["b_in"].reshape(1, 1, D)]
    for l in range(L):
        rows += [bq[l].reshape(1, 1, D),
                 params["bk"][l].reshape(1, 1, D),
                 params["bv"][l].reshape(1, 1, D),
                 params["bo"][l].reshape(1, 1, D),
                 params["b2"][l].reshape(1, 1, D),
                 params["ln1w"][l].reshape(1, 1, D),
                 params["ln1b"][l].reshape(1, 1, D),
                 params["ln2w"][l].reshape(1, 1, D),
                 params["ln2b"][l].reshape(1, 1, D)]
    dvec = jnp.concatenate(rows, axis=0).astype(f32)                    # (1+9L, 1, D)

    # packed (1, FF)-width vectors: per-layer b1, then bm1
    ffvec = jnp.concatenate([params["b1"].reshape(L, 1, FF),
                             params["bm1"].reshape(1, 1, FF)], axis=0).astype(f32)

    # host-side constants (compile-time for fixed B, S)
    pe2 = jnp.tile(params["pe"], (B, 1)).astype(f32)                    # (BS, D)
    row_b = jnp.arange(BS)[:, None] // S
    col_b = (jnp.arange(HBS)[None, :] % BS) // S
    attn_mask = jnp.where(row_b == col_b, 0.0, -1e30).astype(f32)       # (BS, HBS)
    head_mask = ((jnp.arange(HBS)[:, None] // BS) ==
                 (jnp.arange(D)[None, :] // HD)).astype(f32)            # (HBS, D)
    pool = jnp.where(jnp.arange(B)[:, None] == (jnp.arange(BS)[None, :] // S),
                     1.0 / S, 0.0).astype(bf16)                         # (B, BS)

    return dict(
        pe2=pe2,
        w_in=params["w_in"].astype(bf16),
        w_qkvo=w_qkvo,
        w1=params["w1"].astype(bf16),
        w2=params["w2"].astype(bf16),
        wm1=params["wm1"].astype(bf16),
        wm2=params["wm2"].astype(bf16),
        dvec=dvec,
        ffvec=ffvec,
        bm2=params["bm2"].astype(f32),
        attn_mask=attn_mask,
        head_mask=head_mask,
        pool=pool,
    )


@functools.partial(jax.jit, static_argnames=("nhead", "num_layers"))
def transformer_forward(prepped, x, *, nhead, num_layers):
    B, S, IN = x.shape
    out_size = prepped["bm2"].shape[-1]
    x2 = x.reshape(B * S, IN)                    # fold batch into the matmul M dim

    args = (x2, prepped["pe2"], prepped["w_in"], prepped["w_qkvo"],
            prepped["w1"], prepped["w2"], prepped["wm1"], prepped["wm2"],
            prepped["dvec"], prepped["ffvec"], prepped["bm2"],
            prepped["attn_mask"], prepped["head_mask"], prepped["pool"])

    vmem = pl.BlockSpec(memory_space=pltpu.MemorySpace.VMEM)  # everything fits in VMEM
    # TODO(synk): on v7x, at much larger B*S, add a "parallel" grid over folded-row
    # blocks to use both TensorCores; at BS=16 a split would only add overhead.
    return pl.pallas_call(
        functools.partial(transformer_kernel, nhead, num_layers),
        out_shape=jax.ShapeDtypeStruct((B, out_size), jnp.float32),
        in_specs=[vmem] * len(args),
        out_specs=vmem,
    )(*args)


def make_positional_encoding(seq_len, d_model):
    position = jnp.arange(seq_len, dtype=jnp.float32)[:, None]
    div_term = jnp.exp(jnp.arange(0, d_model, 2, dtype=jnp.float32)
                       * (-math.log(10000.0) / d_model))
    pe = jnp.zeros((seq_len, d_model), jnp.float32)
    pe = pe.at[:, 0::2].set(jnp.sin(position * div_term))
    pe = pe.at[:, 1::2].set(jnp.cos(position * div_term))
    return pe


def init_params(key, input_size, output_size, d_model, nhead, num_layers,
                dim_feedforward, seq_len):
    k = jax.random.split(key, 20)
    s = 0.1
    n = jax.random.normal
    L, D, FF = num_layers, d_model, dim_feedforward
    return {
        "pe":   make_positional_encoding(seq_len, D),
        "w_in": s * n(k[0], (input_size, D), jnp.float32),
        "b_in": s * n(k[1], (1, D), jnp.float32),
        "wq":   s * n(k[2], (L, D, D), jnp.float32),
        "wk":   s * n(k[3], (L, D, D), jnp.float32),
        "wv":   s * n(k[4], (L, D, D), jnp.float32),
        "bq":   s * n(k[5], (L, 1, D), jnp.float32),
        "bk":   s * n(k[6], (L, 1, D), jnp.float32),
        "bv":   s * n(k[7], (L, 1, D), jnp.float32),
        "wo":   s * n(k[8], (L, D, D), jnp.float32),
        "bo":   s * n(k[9], (L, 1, D), jnp.float32),
        "w1":   s * n(k[10], (L, D, FF), jnp.float32),
        "b1":   s * n(k[11], (L, 1, FF), jnp.float32),
        "w2":   s * n(k[12], (L, FF, D), jnp.float32),
        "b2":   s * n(k[13], (L, 1, D), jnp.float32),
        "ln1w": jnp.ones((L, 1, D), jnp.float32),
        "ln1b": jnp.zeros((L, 1, D), jnp.float32),
        "ln2w": jnp.ones((L, 1, D), jnp.float32),
        "ln2b": jnp.zeros((L, 1, D), jnp.float32),
        "wm1":  s * n(k[14], (D, FF), jnp.float32),
        "bm1":  s * n(k[15], (1, FF), jnp.float32),
        "wm2":  s * n(k[16], (FF, output_size), jnp.float32),
        "bm2":  s * n(k[17], (1, output_size), jnp.float32),
    }


def reference_forward(params, x, nhead):
    """Pure-JAX f32 reference with identical math (inference-mode dropout)."""
    hi = jax.lax.Precision.HIGHEST

    def ln(v, w, b):
        mu = jnp.mean(v, axis=-1, keepdims=True)
        var = jnp.mean((v - mu) ** 2, axis=-1, keepdims=True)
        return (v - mu) * jax.lax.rsqrt(var + 1e-5) * w + b

    D = params["pe"].shape[-1]
    HD = D // nhead
    scale = 1.0 / math.sqrt(HD)
    outs = []
    for b in range(x.shape[0]):
        h = jnp.dot(x[b], params["w_in"], precision=hi) + params["b_in"] + params["pe"]
        for l in range(params["wq"].shape[0]):
            q = jnp.dot(h, params["wq"][l], precision=hi) + params["bq"][l]
            k_ = jnp.dot(h, params["wk"][l], precision=hi) + params["bk"][l]
            v = jnp.dot(h, params["wv"][l], precision=hi) + params["bv"][l]
            q = q * scale
            heads = []
            for hh in range(nhead):
                sl = slice(hh * HD, (hh + 1) * HD)
                p = jax.nn.softmax(jnp.dot(q[:, sl], k_[:, sl].T, precision=hi), axis=-1)
                heads.append(jnp.dot(p, v[:, sl], precision=hi))
            attn = jnp.dot(jnp.concatenate(heads, -1), params["wo"][l],
                           precision=hi) + params["bo"][l]
            h = ln(h + attn, params["ln1w"][l], params["ln1b"][l])
            ff = jnp.maximum(jnp.dot(h, params["w1"][l], precision=hi) + params["b1"][l], 0.0)
            ff = jnp.dot(ff, params["w2"][l], precision=hi) + params["b2"][l]
            h = ln(h + ff, params["ln2w"][l], params["ln2b"][l])
        pooled = jnp.mean(h, axis=0, keepdims=True)
        m = jnp.maximum(jnp.dot(pooled, params["wm1"], precision=hi) + params["bm1"], 0.0)
        outs.append(jnp.dot(m, params["wm2"], precision=hi) + params["bm2"])
    return jnp.concatenate(outs, axis=0)


if __name__ == "__main__":
    # Small shapes consistent with the module's forward contract.
    BATCH, SEQ, INPUT_SIZE, OUTPUT_SIZE = 2, 8, 8, 4
    D_MODEL, NHEAD, NUM_LAYERS, DIM_FF = 64, 4, 2, 128
    # TODO(synk): dropout layers are inference-mode identities (no train-time RNG masking).

    key = jax.random.PRNGKey(0)
    kx, kp = jax.random.split(key)
    x = jax.random.normal(kx, (BATCH, SEQ, INPUT_SIZE), jnp.float32)
    params = init_params(kp, INPUT_SIZE, OUTPUT_SIZE, D_MODEL, NHEAD,
                         NUM_LAYERS, DIM_FF, SEQ)

    # One-time param prep (bf16 weights, packed biases, precomputed masks / PE tile).
    prepped = prepare_params(params, BATCH, SEQ, NHEAD)

    out = transformer_forward(prepped, x, nhead=NHEAD, num_layers=NUM_LAYERS)
    out = jax.block_until_ready(out)

    ref = reference_forward(params, x, NHEAD)
    assert out.shape == (BATCH, OUTPUT_SIZE)
    assert bool(jnp.all(jnp.isfinite(out)))
    # Tolerance re-validated for bf16 matmul operands (f32 accumulation).
    assert bool(jnp.allclose(out, ref, atol=2e-2, rtol=2e-2))

    print("KERNEL_OK")
</pallas_src>

<mosaic_0001>
module attributes {stable_mosaic.version = 11 : i64} {
  func.func @transformer_kernel(%arg0: memref<16x8xf32, #tpu.memory_space<vmem>>, %arg1: memref<16x64xf32, #tpu.memory_space<vmem>>, %arg2: memref<8x64xbf16, #tpu.memory_space<vmem>>, %arg3: memref<8x64x64xbf16, #tpu.memory_space<vmem>>, %arg4: memref<2x64x128xbf16, #tpu.memory_space<vmem>>, %arg5: memref<2x128x64xbf16, #tpu.memory_space<vmem>>, %arg6: memref<64x128xbf16, #tpu.memory_space<vmem>>, %arg7: memref<128x4xbf16, #tpu.memory_space<vmem>>, %arg8: memref<19x1x64xf32, #tpu.memory_space<vmem>>, %arg9: memref<3x1x128xf32, #tpu.memory_space<vmem>>, %arg10: memref<1x4xf32, #tpu.memory_space<vmem>>, %arg11: memref<16x64xf32, #tpu.memory_space<vmem>>, %arg12: memref<64x64xf32, #tpu.memory_space<vmem>>, %arg13: memref<2x16xbf16, #tpu.memory_space<vmem>>, %arg14: memref<2x4xf32, #tpu.memory_space<vmem>>) attributes {dimension_semantics = [], scalar_prefetch = 0 : i64, scratch_operands = 0 : i64, tpu.core_type = #tpu.core_type<tc>} {
    %c0 = arith.constant 0 : index
    %c0_0 = arith.constant 0 : index
    %0 = vector.load %arg11[%c0, %c0_0] : memref<16x64xf32, #tpu.memory_space<vmem>>, vector<16x64xf32>
    %c0_1 = arith.constant 0 : index
    %c0_2 = arith.constant 0 : index
    %1 = vector.load %arg12[%c0_1, %c0_2] : memref<64x64xf32, #tpu.memory_space<vmem>>, vector<64x64xf32>
    %2 = arith.truncf %1 : vector<64x64xf32> to vector<64x64xbf16>
    %c0_3 = arith.constant 0 : index
    %c0_4 = arith.constant 0 : index
    %3 = vector.load %arg0[%c0_3, %c0_4] : memref<16x8xf32, #tpu.memory_space<vmem>>, vector<16x8xf32>
    %4 = arith.truncf %3 : vector<16x8xf32> to vector<16x8xbf16>
    %c0_5 = arith.constant 0 : index
    %c0_6 = arith.constant 0 : index
    %5 = vector.load %arg2[%c0_5, %c0_6] : memref<8x64xbf16, #tpu.memory_space<vmem>>, vector<8x64xbf16>
    %cst = arith.constant dense<0.000000e+00> : vector<16x64xf32>
    %6 = tpu.matmul %4, %5, %cst {dimension_numbers = #tpu.dot_dimension_numbers<[1], [0], [0], [1], [0, 0, 1, 1], [], []>} : vector<16x8xbf16>, vector<8x64xbf16>, vector<16x64xf32> -> vector<16x64xf32>
    %c0_7 = arith.constant 0 : index
    %c0_8 = arith.constant 0 : index
    %c0_9 = arith.constant 0 : index
    %7 = vector.load %arg8[%c0_7, %c0_8, %c0_9] : memref<19x1x64xf32, #tpu.memory_space<vmem>>, vector<1x1x64xf32>
    %8 = vector.shape_cast %7 : vector<1x1x64xf32> to vector<1x64xf32>
    %9 = vector.broadcast %8 : vector<1x64xf32> to vector<16x64xf32>
    %10 = arith.addf %6, %9 : vector<16x64xf32>
    %c0_10 = arith.constant 0 : index
    %c0_11 = arith.constant 0 : index
    %11 = vector.load %arg1[%c0_10, %c0_11] : memref<16x64xf32, #tpu.memory_space<vmem>>, vector<16x64xf32>
    %12 = arith.addf %10, %11 : vector<16x64xf32>
    %13 = arith.truncf %12 : vector<16x64xf32> to vector<16x64xbf16>
    %c0_12 = arith.constant 0 : index
    %c0_13 = arith.constant 0 : index
    %c0_14 = arith.constant 0 : index
    %14 = vector.load %arg3[%c0_12, %c0_13, %c0_14] : memref<8x64x64xbf16, #tpu.memory_space<vmem>>, vector<1x64x64xbf16>
    %15 = vector.shape_cast %14 : vector<1x64x64xbf16> to vector<64x64xbf16>
    %cst_15 = arith.constant dense<0.000000e+00> : vector<16x64xf32>
    %16 = tpu.matmul %13, %15, %cst_15 {dimension_numbers = #tpu.dot_dimension_numbers<[1], [0], [0], [1], [0, 0, 1, 1], [], []>} : vector<16x64xbf16>, vector<64x64xbf16>, vector<16x64xf32> -> vector<16x64xf32>
    %c1 = arith.constant 1 : index
    %c0_16 = arith.constant 0 : index
    %c0_17 = arith.constant 0 : index
    %17 = vector.load %arg8[%c1, %c0_16, %c0_17] : memref<19x1x64xf32, #tpu.memory_space<vmem>>, vector<1x1x64xf32>
    %18 = vector.shape_cast %17 : vector<1x1x64xf32> to vector<1x64xf32>
    %19 = vector.broadcast %18 : vector<1x64xf32> to vector<16x64xf32>
    %20 = arith.addf %16, %19 : vector<16x64xf32>
    %c1_18 = arith.constant 1 : index
    %c0_19 = arith.constant 0 : index
    %c0_20 = arith.constant 0 : index
    %21 = vector.load %arg3[%c1_18, %c0_19, %c0_20] : memref<8x64x64xbf16, #tpu.memory_space<vmem>>, vector<1x64x64xbf16>
    %22 = vector.shape_cast %21 : vector<1x64x64xbf16> to vector<64x64xbf16>
    %cst_21 = arith.constant dense<0.000000e+00> : vector<16x64xf32>
    %23 = tpu.matmul %13, %22, %cst_21 {dimension_numbers = #tpu.dot_dimension_numbers<[1], [0], [0], [1], [0, 0, 1, 1], [], []>} : vector<16x64xbf16>, vector<64x64xbf16>, vector<16x64xf32> -> vector<16x64xf32>
    %c2 = arith.constant 2 : index
    %c0_22 = arith.constant 0 : index
    %c0_23 = arith.constant 0 : index
    %24 = vector.load %arg8[%c2, %c0_22, %c0_23] : memref<19x1x64xf32, #tpu.memory_space<vmem>>, vector<1x1x64xf32>
    %25 = vector.shape_cast %24 : vector<1x1x64xf32> to vector<1x64xf32>
    %26 = vector.broadcast %25 : vector<1x64xf32> to vector<16x64xf32>
    %27 = arith.addf %23, %26 : vector<16x64xf32>
    %c2_24 = arith.constant 2 : index
    %c0_25 = arith.constant 0 : index
    %c0_26 = arith.constant 0 : index
    %28 = vector.load %arg3[%c2_24, %c0_25, %c0_26] : memref<8x64x64xbf16, #tpu.memory_space<vmem>>, vector<1x64x64xbf16>
    %29 = vector.shape_cast %28 : vector<1x64x64xbf16> to vector<64x64xbf16>
    %cst_27 = arith.constant dense<0.000000e+00> : vector<16x64xf32>
    %30 = tpu.matmul %13, %29, %cst_27 {dimension_numbers = #tpu.dot_dimension_numbers<[1], [0], [0], [1], [0, 0, 1, 1], [], []>} : vector<16x64xbf16>, vector<64x64xbf16>, vector<16x64xf32> -> vector<16x64xf32>
    %c3 = arith.constant 3 : index
    %c0_28 = arith.constant 0 : index
    %c0_29 = arith.constant 0 : index
    %31 = vector.load %arg8[%c3, %c0_28, %c0_29] : memref<19x1x64xf32, #tpu.memory_space<vmem>>, vector<1x1x64xf32>
    %32 = vector.shape_cast %31 : vector<1x1x64xf32> to vector<1x64xf32>
    %33 = vector.broadcast %32 : vector<1x64xf32> to vector<16x64xf32>
    %34 = arith.addf %30, %33 : vector<16x64xf32>
    %35 = tpu.concatenate %27, %27, %27, %27 in 0 : vector<16x64xf32>, vector<16x64xf32>, vector<16x64xf32>, vector<16x64xf32> -> vector<64x64xf32>
    %36 = arith.mulf %35, %1 : vector<64x64xf32>
    %37 = arith.truncf %36 : vector<64x64xf32> to vector<64x64xbf16>
    %38 = tpu.concatenate %34, %34, %34, %34 in 0 : vector<16x64xf32>, vector<16x64xf32>, vector<16x64xf32>, vector<16x64xf32> -> vector<64x64xf32>
    %39 = arith.mulf %38, %1 : vector<64x64xf32>
    %40 = arith.truncf %39 : vector<64x64xf32> to vector<64x64xbf16>
    %41 = arith.truncf %20 : vector<16x64xf32> to vector<16x64xbf16>
    %cst_30 = arith.constant dense<0.000000e+00> : vector<16x64xf32>
    %42 = tpu.matmul %41, %37, %cst_30 {dimension_numbers = #tpu.dot_dimension_numbers<[1], [1], [0], [0], [0, 0, 1, 0], [], []>} : vector<16x64xbf16>, vector<64x64xbf16>, vector<16x64xf32> -> vector<16x64xf32>
    %43 = arith.addf %42, %0 : vector<16x64xf32>
    %cst_31 = arith.constant dense<0xFF800000> : vector<16xf32>
    %44 = vector.multi_reduction <maximumf>, %43, %cst_31 [1] : vector<16x64xf32> to vector<16xf32>
    %45 = vector.shape_cast %44 : vector<16xf32> to vector<16x1xf32>
    %46 = vector.broadcast %45 : vector<16x1xf32> to vector<16x64xf32>
    %47 = arith.subf %43, %46 : vector<16x64xf32>
    %48 = math.exp %47 : vector<16x64xf32>
    %49 = arith.truncf %48 : vector<16x64xf32> to vector<16x64xbf16>
    %cst_32 = arith.constant dense<0.000000e+00> : vector<16x64xf32>
    %50 = tpu.matmul %49, %40, %cst_32 {dimension_numbers = #tpu.dot_dimension_numbers<[1], [0], [0], [1], [0, 0, 1, 1], [], []>} : vector<16x64xbf16>, vector<64x64xbf16>, vector<16x64xf32> -> vector<16x64xf32>
    %cst_33 = arith.constant dense<0.000000e+00> : vector<16x64xf32>
    %51 = tpu.matmul %49, %2, %cst_33 {dimension_numbers = #tpu.dot_dimension_numbers<[1], [0], [0], [1], [0, 0, 1, 1], [], []>} : vector<16x64xbf16>, vector<64x64xbf16>, vector<16x64xf32> -> vector<16x64xf32>
    %52 = tpu.reciprocal %51 {approx = true} : vector<16x64xf32> -> vector<16x64xf32>
    %53 = arith.mulf %50, %52 : vector<16x64xf32>
    %54 = arith.truncf %53 : vector<16x64xf32> to vector<16x64xbf16>
    %c3_34 = arith.constant 3 : index
    %c0_35 = arith.constant 0 : index
    %c0_36 = arith.constant 0 : index
    %55 = vector.load %arg3[%c3_34, %c0_35, %c0_36] : memref<8x64x64xbf16, #tpu.memory_space<vmem>>, vector<1x64x64xbf16>
    %56 = vector.shape_cast %55 : vector<1x64x64xbf16> to vector<64x64xbf16>
    %cst_37 = arith.constant dense<0.000000e+00> : vector<16x64xf32>
    %57 = tpu.matmul %54, %56, %cst_37 {dimension_numbers = #tpu.dot_dimension_numbers<[1], [0], [0], [1], [0, 0, 1, 1], [], []>} : vector<16x64xbf16>, vector<64x64xbf16>, vector<16x64xf32> -> vector<16x64xf32>
    %c4 = arith.constant 4 : index
    %c0_38 = arith.constant 0 : index
    %c0_39 = arith.constant 0 : index
    %58 = vector.load %arg8[%c4, %c0_38, %c0_39] : memref<19x1x64xf32, #tpu.memory_space<vmem>>, vector<1x1x64xf32>
    %59 = vector.shape_cast %58 : vector<1x1x64xf32> to vector<1x64xf32>
    %60 = vector.broadcast %59 : vector<1x64xf32> to vector<16x64xf32>
    %61 = arith.addf %57, %60 : vector<16x64xf32>
    %62 = arith.addf %12, %61 : vector<16x64xf32>
    %c6 = arith.constant 6 : index
    %c0_40 = arith.constant 0 : index
    %c0_41 = arith.constant 0 : index
    %63 = vector.load %arg8[%c6, %c0_40, %c0_41] : memref<19x1x64xf32, #tpu.memory_space<vmem>>, vector<1x1x64xf32>
    %64 = vector.shape_cast %63 : vector<1x1x64xf32> to vector<1x64xf32>
    %c7 = arith.constant 7 : index
    %c0_42 = arith.constant 0 : index
    %c0_43 = arith.constant 0 : index
    %65 = vector.load %arg8[%c7, %c0_42, %c0_43] : memref<19x1x64xf32, #tpu.memory_space<vmem>>, vector<1x1x64xf32>
    %66 = vector.shape_cast %65 : vector<1x1x64xf32> to vector<1x64xf32>
    %cst_44 = arith.constant dense<0.000000e+00> : vector<16xf32>
    %67 = vector.multi_reduction <add>, %62, %cst_44 [1] : vector<16x64xf32> to vector<16xf32>
    %68 = vector.shape_cast %67 : vector<16xf32> to vector<16x1xf32>
    %cst_45 = arith.constant 6.400000e+01 : f32
    %69 = vector.broadcast %cst_45 : f32 to vector<16x1xf32>
    %70 = arith.divf %68, %69 : vector<16x1xf32>
    %71 = vector.broadcast %70 : vector<16x1xf32> to vector<16x64xf32>
    %72 = arith.subf %62, %71 : vector<16x64xf32>
    %73 = arith.mulf %72, %72 : vector<16x64xf32>
    %cst_46 = arith.constant dense<0.000000e+00> : vector<16xf32>
    %74 = vector.multi_reduction <add>, %73, %cst_46 [1] : vector<16x64xf32> to vector<16xf32>
    %75 = vector.shape_cast %74 : vector<16xf32> to vector<16x1xf32>
    %cst_47 = arith.constant 6.400000e+01 : f32
    %76 = vector.broadcast %cst_47 : f32 to vector<16x1xf32>
    %77 = arith.divf %75, %76 : vector<16x1xf32>
    %78 = vector.broadcast %70 : vector<16x1xf32> to vector<16x64xf32>
    %79 = arith.subf %62, %78 : vector<16x64xf32>
    %cst_48 = arith.constant 9.99999974E-6 : f32
    %80 = vector.broadcast %cst_48 : f32 to vector<16x1xf32>
    %81 = arith.addf %77, %80 : vector<16x1xf32>
    %82 = math.rsqrt %81 : vector<16x1xf32>
    %83 = vector.broadcast %82 : vector<16x1xf32> to vector<16x64xf32>
    %84 = arith.mulf %79, %83 : vector<16x64xf32>
    %85 = vector.broadcast %64 : vector<1x64xf32> to vector<16x64xf32>
    %86 = arith.mulf %84, %85 : vector<16x64xf32>
    %87 = vector.broadcast %66 : vector<1x64xf32> to vector<16x64xf32>
    %88 = arith.addf %86, %87 : vector<16x64xf32>
    %89 = arith.truncf %88 : vector<16x64xf32> to vector<16x64xbf16>
    %c0_49 = arith.constant 0 : index
    %c0_50 = arith.constant 0 : index
    %c0_51 = arith.constant 0 : index
    %90 = vector.load %arg4[%c0_49, %c0_50, %c0_51] : memref<2x64x128xbf16, #tpu.memory_space<vmem>>, vector<1x64x128xbf16>
    %91 = vector.shape_cast %90 : vector<1x64x128xbf16> to vector<64x128xbf16>
    %cst_52 = arith.constant dense<0.000000e+00> : vector<16x128xf32>
    %92 = tpu.matmul %89, %91, %cst_52 {dimension_numbers = #tpu.dot_dimension_numbers<[1], [0], [0], [1], [0, 0, 1, 1], [], []>} : vector<16x64xbf16>, vector<64x128xbf16>, vector<16x128xf32> -> vector<16x128xf32>
    %c0_53 = arith.constant 0 : index
    %c0_54 = arith.constant 0 : index
    %c0_55 = arith.constant 0 : index
    %93 = vector.load %arg9[%c0_53, %c0_54, %c0_55] : memref<3x1x128xf32, #tpu.memory_space<vmem>>, vector<1x1x128xf32>
    %94 = vector.shape_cast %93 : vector<1x1x128xf32> to vector<1x128xf32>
    %95 = vector.broadcast %94 : vector<1x128xf32> to vector<16x128xf32>
    %96 = arith.addf %92, %95 : vector<16x128xf32>
    %cst_56 = arith.constant 0.000000e+00 : f32
    %97 = vector.broadcast %cst_56 : f32 to vector<16x128xf32>
    %98 = arith.maximumf %96, %97 : vector<16x128xf32>
    %99 = arith.truncf %98 : vector<16x128xf32> to vector<16x128xbf16>
    %c0_57 = arith.constant 0 : index
    %c0_58 = arith.constant 0 : index
    %c0_59 = arith.constant 0 : index
    %100 = vector.load %arg5[%c0_57, %c0_58, %c0_59] : memref<2x128x64xbf16, #tpu.memory_space<vmem>>, vector<1x128x64xbf16>
    %101 = vector.shape_cast %100 : vector<1x128x64xbf16> to vector<128x64xbf16>
    %cst_60 = arith.constant dense<0.000000e+00> : vector<16x64xf32>
    %102 = tpu.matmul %99, %101, %cst_60 {dimension_numbers = #tpu.dot_dimension_numbers<[1], [0], [0], [1], [0, 0, 1, 1], [], []>} : vector<16x128xbf16>, vector<128x64xbf16>, vector<16x64xf32> -> vector<16x64xf32>
    %c5 = arith.constant 5 : index
    %c0_61 = arith.constant 0 : index
    %c0_62 = arith.constant 0 : index
    %103 = vector.load %arg8[%c5, %c0_61, %c0_62] : memref<19x1x64xf32, #tpu.memory_space<vmem>>, vector<1x1x64xf32>
    %104 = vector.shape_cast %103 : vector<1x1x64xf32> to vector<1x64xf32>
    %105 = vector.broadcast %104 : vector<1x64xf32> to vector<16x64xf32>
    %106 = arith.addf %102, %105 : vector<16x64xf32>
    %107 = arith.addf %88, %106 : vector<16x64xf32>
    %c8 = arith.constant 8 : index
    %c0_63 = arith.constant 0 : index
    %c0_64 = arith.constant 0 : index
    %108 = vector.load %arg8[%c8, %c0_63, %c0_64] : memref<19x1x64xf32, #tpu.memory_space<vmem>>, vector<1x1x64xf32>
    %109 = vector.shape_cast %108 : vector<1x1x64xf32> to vector<1x64xf32>
    %c9 = arith.constant 9 : index
    %c0_65 = arith.constant 0 : index
    %c0_66 = arith.constant 0 : index
    %110 = vector.load %arg8[%c9, %c0_65, %c0_66] : memref<19x1x64xf32, #tpu.memory_space<vmem>>, vector<1x1x64xf32>
    %111 = vector.shape_cast %110 : vector<1x1x64xf32> to vector<1x64xf32>
    %cst_67 = arith.constant dense<0.000000e+00> : vector<16xf32>
    %112 = vector.multi_reduction <add>, %107, %cst_67 [1] : vector<16x64xf32> to vector<16xf32>
    %113 = vector.shape_cast %112 : vector<16xf32> to vector<16x1xf32>
    %cst_68 = arith.constant 6.400000e+01 : f32
    %114 = vector.broadcast %cst_68 : f32 to vector<16x1xf32>
    %115 = arith.divf %113, %114 : vector<16x1xf32>
    %116 = vector.broadcast %115 : vector<16x1xf32> to vector<16x64xf32>
    %117 = arith.subf %107, %116 : vector<16x64xf32>
    %118 = arith.mulf %117, %117 : vector<16x64xf32>
    %cst_69 = arith.constant dense<0.000000e+00> : vector<16xf32>
    %119 = vector.multi_reduction <add>, %118, %cst_69 [1] : vector<16x64xf32> to vector<16xf32>
    %120 = vector.shape_cast %119 : vector<16xf32> to vector<16x1xf32>
    %cst_70 = arith.constant 6.400000e+01 : f32
    %121 = vector.broadcast %cst_70 : f32 to vector<16x1xf32>
    %122 = arith.divf %120, %121 : vector<16x1xf32>
    %123 = vector.broadcast %115 : vector<16x1xf32> to vector<16x64xf32>
    %124 = arith.subf %107, %123 : vector<16x64xf32>
    %cst_71 = arith.constant 9.99999974E-6 : f32
    %125 = vector.broadcast %cst_71 : f32 to vector<16x1xf32>
    %126 = arith.addf %122, %125 : vector<16x1xf32>
    %127 = math.rsqrt %126 : vector<16x1xf32>
    %128 = vector.broadcast %127 : vector<16x1xf32> to vector<16x64xf32>
    %129 = arith.mulf %124, %128 : vector<16x64xf32>
    %130 = vector.broadcast %109 : vector<1x64xf32> to vector<16x64xf32>
    %131 = arith.mulf %129, %130 : vector<16x64xf32>
    %132 = vector.broadcast %111 : vector<1x64xf32> to vector<16x64xf32>
    %133 = arith.addf %131, %132 : vector<16x64xf32>
    %134 = arith.truncf %133 : vector<16x64xf32> to vector<16x64xbf16>
    %c4_72 = arith.constant 4 : index
    %c0_73 = arith.constant 0 : index
    %c0_74 = arith.constant 0 : index
    %135 = vector.load %arg3[%c4_72, %c0_73, %c0_74] : memref<8x64x64xbf16, #tpu.memory_space<vmem>>, vector<1x64x64xbf16>
    %136 = vector.shape_cast %135 : vector<1x64x64xbf16> to vector<64x64xbf16>
    %cst_75 = arith.constant dense<0.000000e+00> : vector<16x64xf32>
    %137 = tpu.matmul %134, %136, %cst_75 {dimension_numbers = #tpu.dot_dimension_numbers<[1], [0], [0], [1], [0, 0, 1, 1], [], []>} : vector<16x64xbf16>, vector<64x64xbf16>, vector<16x64xf32> -> vector<16x64xf32>
    %c10 = arith.constant 10 : index
    %c0_76 = arith.constant 0 : index
    %c0_77 = arith.constant 0 : index
    %138 = vector.load %arg8[%c10, %c0_76, %c0_77] : memref<19x1x64xf32, #tpu.memory_space<vmem>>, vector<1x1x64xf32>
    %139 = vector.shape_cast %138 : vector<1x1x64xf32> to vector<1x64xf32>
    %140 = vector.broadcast %139 : vector<1x64xf32> to vector<16x64xf32>
    %141 = arith.addf %137, %140 : vector<16x64xf32>
    %c5_78 = arith.constant 5 : index
    %c0_79 = arith.constant 0 : index
    %c0_80 = arith.constant 0 : index
    %142 = vector.load %arg3[%c5_78, %c0_79, %c0_80] : memref<8x64x64xbf16, #tpu.memory_space<vmem>>, vector<1x64x64xbf16>
    %143 = vector.shape_cast %142 : vector<1x64x64xbf16> to vector<64x64xbf16>
    %cst_81 = arith.constant dense<0.000000e+00> : vector<16x64xf32>
    %144 = tpu.matmul %134, %143, %cst_81 {dimension_numbers = #tpu.dot_dimension_numbers<[1], [0], [0], [1], [0, 0, 1, 1], [], []>} : vector<16x64xbf16>, vector<64x64xbf16>, vector<16x64xf32> -> vector<16x64xf32>
    %c11 = arith.constant 11 : index
    %c0_82 = arith.constant 0 : index
    %c0_83 = arith.constant 0 : index
    %145 = vector.load %arg8[%c11, %c0_82, %c0_83] : memref<19x1x64xf32, #tpu.memory_space<vmem>>, vector<1x1x64xf32>
    %146 = vector.shape_cast %145 : vector<1x1x64xf32> to vector<1x64xf32>
    %147 = vector.broadcast %146 : vector<1x64xf32> to vector<16x64xf32>
    %148 = arith.addf %144, %147 : vector<16x64xf32>
    %c6_84 = arith.constant 6 : index
    %c0_85 = arith.constant 0 : index
    %c0_86 = arith.constant 0 : index
    %149 = vector.load %arg3[%c6_84, %c0_85, %c0_86] : memref<8x64x64xbf16, #tpu.memory_space<vmem>>, vector<1x64x64xbf16>
    %150 = vector.shape_cast %149 : vector<1x64x64xbf16> to vector<64x64xbf16>
    %cst_87 = arith.constant dense<0.000000e+00> : vector<16x64xf32>
    %151 = tpu.matmul %134, %150, %cst_87 {dimension_numbers = #tpu.dot_dimension_numbers<[1], [0], [0], [1], [0, 0, 1, 1], [], []>} : vector<16x64xbf16>, vector<64x64xbf16>, vector<16x64xf32> -> vector<16x64xf32>
    %c12 = arith.constant 12 : index
    %c0_88 = arith.constant 0 : index
    %c0_89 = arith.constant 0 : index
    %152 = vector.load %arg8[%c12, %c0_88, %c0_89] : memref<19x1x64xf32, #tpu.memory_space<vmem>>, vector<1x1x64xf32>
    %153 = vector.shape_cast %152 : vector<1x1x64xf32> to vector<1x64xf32>
    %154 = vector.broadcast %153 : vector<1x64xf32> to vector<16x64xf32>
    %155 = arith.addf %151, %154 : vector<16x64xf32>
    %156 = tpu.concatenate %148, %148, %148, %148 in 0 : vector<16x64xf32>, vector<16x64xf32>, vector<16x64xf32>, vector<16x64xf32> -> vector<64x64xf32>
    %157 = arith.mulf %156, %1 : vector<64x64xf32>
    %158 = arith.truncf %157 : vector<64x64xf32> to vector<64x64xbf16>
    %159 = tpu.concatenate %155, %155, %155, %155 in 0 : vector<16x64xf32>, vector<16x64xf32>, vector<16x64xf32>, vector<16x64xf32> -> vector<64x64xf32>
    %160 = arith.mulf %159, %1 : vector<64x64xf32>
    %161 = arith.truncf %160 : vector<64x64xf32> to vector<64x64xbf16>
    %162 = arith.truncf %141 : vector<16x64xf32> to vector<16x64xbf16>
    %cst_90 = arith.constant dense<0.000000e+00> : vector<16x64xf32>
    %163 = tpu.matmul %162, %158, %cst_90 {dimension_numbers = #tpu.dot_dimension_numbers<[1], [1], [0], [0], [0, 0, 1, 0], [], []>} : vector<16x64xbf16>, vector<64x64xbf16>, vector<16x64xf32> -> vector<16x64xf32>
    %164 = arith.addf %163, %0 : vector<16x64xf32>
    %cst_91 = arith.constant dense<0xFF800000> : vector<16xf32>
    %165 = vector.multi_reduction <maximumf>, %164, %cst_91 [1] : vector<16x64xf32> to vector<16xf32>
    %166 = vector.shape_cast %165 : vector<16xf32> to vector<16x1xf32>
    %167 = vector.broadcast %166 : vector<16x1xf32> to vector<16x64xf32>
    %168 = arith.subf %164, %167 : vector<16x64xf32>
    %169 = math.exp %168 : vector<16x64xf32>
    %170 = arith.truncf %169 : vector<16x64xf32> to vector<16x64xbf16>
    %cst_92 = arith.constant dense<0.000000e+00> : vector<16x64xf32>
    %171 = tpu.matmul %170, %161, %cst_92 {dimension_numbers = #tpu.dot_dimension_numbers<[1], [0], [0], [1], [0, 0, 1, 1], [], []>} : vector<16x64xbf16>, vector<64x64xbf16>, vector<16x64xf32> -> vector<16x64xf32>
    %cst_93 = arith.constant dense<0.000000e+00> : vector<16x64xf32>
    %172 = tpu.matmul %170, %2, %cst_93 {dimension_numbers = #tpu.dot_dimension_numbers<[1], [0], [0], [1], [0, 0, 1, 1], [], []>} : vector<16x64xbf16>, vector<64x64xbf16>, vector<16x64xf32> -> vector<16x64xf32>
    %173 = tpu.reciprocal %172 {approx = true} : vector<16x64xf32> -> vector<16x64xf32>
    %174 = arith.mulf %171, %173 : vector<16x64xf32>
    %175 = arith.truncf %174 : vector<16x64xf32> to vector<16x64xbf16>
    %c7_94 = arith.constant 7 : index
    %c0_95 = arith.constant 0 : index
    %c0_96 = arith.constant 0 : index
    %176 = vector.load %arg3[%c7_94, %c0_95, %c0_96] : memref<8x64x64xbf16, #tpu.memory_space<vmem>>, vector<1x64x64xbf16>
    %177 = vector.shape_cast %176 : vector<1x64x64xbf16> to vector<64x64xbf16>
    %cst_97 = arith.constant dense<0.000000e+00> : vector<16x64xf32>
    %178 = tpu.matmul %175, %177, %cst_97 {dimension_numbers = #tpu.dot_dimension_numbers<[1], [0], [0], [1], [0, 0, 1, 1], [], []>} : vector<16x64xbf16>, vector<64x64xbf16>, vector<16x64xf32> -> vector<16x64xf32>
    %c13 = arith.constant 13 : index
    %c0_98 = arith.constant 0 : index
    %c0_99 = arith.constant 0 : index
    %179 = vector.load %arg8[%c13, %c0_98, %c0_99] : memref<19x1x64xf32, #tpu.memory_space<vmem>>, vector<1x1x64xf32>
    %180 = vector.shape_cast %179 : vector<1x1x64xf32> to vector<1x64xf32>
    %181 = vector.broadcast %180 : vector<1x64xf32> to vector<16x64xf32>
    %182 = arith.addf %178, %181 : vector<16x64xf32>
    %183 = arith.addf %133, %182 : vector<16x64xf32>
    %c15 = arith.constant 15 : index
    %c0_100 = arith.constant 0 : index
    %c0_101 = arith.constant 0 : index
    %184 = vector.load %arg8[%c15, %c0_100, %c0_101] : memref<19x1x64xf32, #tpu.memory_space<vmem>>, vector<1x1x64xf32>
    %185 = vector.shape_cast %184 : vector<1x1x64xf32> to vector<1x64xf32>
    %c16 = arith.constant 16 : index
    %c0_102 = arith.constant 0 : index
    %c0_103 = arith.constant 0 : index
    %186 = vector.load %arg8[%c16, %c0_102, %c0_103] : memref<19x1x64xf32, #tpu.memory_space<vmem>>, vector<1x1x64xf32>
    %187 = vector.shape_cast %186 : vector<1x1x64xf32> to vector<1x64xf32>
    %cst_104 = arith.constant dense<0.000000e+00> : vector<16xf32>
    %188 = vector.multi_reduction <add>, %183, %cst_104 [1] : vector<16x64xf32> to vector<16xf32>
    %189 = vector.shape_cast %188 : vector<16xf32> to vector<16x1xf32>
    %cst_105 = arith.constant 6.400000e+01 : f32
    %190 = vector.broadcast %cst_105 : f32 to vector<16x1xf32>
    %191 = arith.divf %189, %190 : vector<16x1xf32>
    %192 = vector.broadcast %191 : vector<16x1xf32> to vector<16x64xf32>
    %193 = arith.subf %183, %192 : vector<16x64xf32>
    %194 = arith.mulf %193, %193 : vector<16x64xf32>
    %cst_106 = arith.constant dense<0.000000e+00> : vector<16xf32>
    %195 = vector.multi_reduction <add>, %194, %cst_106 [1] : vector<16x64xf32> to vector<16xf32>
    %196 = vector.shape_cast %195 : vector<16xf32> to vector<16x1xf32>
    %cst_107 = arith.constant 6.400000e+01 : f32
    %197 = vector.broadcast %cst_107 : f32 to vector<16x1xf32>
    %198 = arith.divf %196, %197 : vector<16x1xf32>
    %199 = vector.broadcast %191 : vector<16x1xf32> to vector<16x64xf32>
    %200 = arith.subf %183, %199 : vector<16x64xf32>
    %cst_108 = arith.constant 9.99999974E-6 : f32
    %201 = vector.broadcast %cst_108 : f32 to vector<16x1xf32>
    %202 = arith.addf %198, %201 : vector<16x1xf32>
    %203 = math.rsqrt %202 : vector<16x1xf32>
    %204 = vector.broadcast %203 : vector<16x1xf32> to vector<16x64xf32>
    %205 = arith.mulf %200, %204 : vector<16x64xf32>
    %206 = vector.broadcast %185 : vector<1x64xf32> to vector<16x64xf32>
    %207 = arith.mulf %205, %206 : vector<16x64xf32>
    %208 = vector.broadcast %187 : vector<1x64xf32> to vector<16x64xf32>
    %209 = arith.addf %207, %208 : vector<16x64xf32>
    %210 = arith.truncf %209 : vector<16x64xf32> to vector<16x64xbf16>
    %c1_109 = arith.constant 1 : index
    %c0_110 = arith.constant 0 : index
    %c0_111 = arith.constant 0 : index
    %211 = vector.load %arg4[%c1_109, %c0_110, %c0_111] : memref<2x64x128xbf16, #tpu.memory_space<vmem>>, vector<1x64x128xbf16>
    %212 = vector.shape_cast %211 : vector<1x64x128xbf16> to vector<64x128xbf16>
    %cst_112 = arith.constant dense<0.000000e+00> : vector<16x128xf32>
    %213 = tpu.matmul %210, %212, %cst_112 {dimension_numbers = #tpu.dot_dimension_numbers<[1], [0], [0], [1], [0, 0, 1, 1], [], []>} : vector<16x64xbf16>, vector<64x128xbf16>, vector<16x128xf32> -> vector<16x128xf32>
    %c1_113 = arith.constant 1 : index
    %c0_114 = arith.constant 0 : index
    %c0_115 = arith.constant 0 : index
    %214 = vector.load %arg9[%c1_113, %c0_114, %c0_115] : memref<3x1x128xf32, #tpu.memory_space<vmem>>, vector<1x1x128xf32>
    %215 = vector.shape_cast %214 : vector<1x1x128xf32> to vector<1x128xf32>
    %216 = vector.broadcast %215 : vector<1x128xf32> to vector<16x128xf32>
    %217 = arith.addf %213, %216 : vector<16x128xf32>
    %cst_116 = arith.constant 0.000000e+00 : f32
    %218 = vector.broadcast %cst_116 : f32 to vector<16x128xf32>
    %219 = arith.maximumf %217, %218 : vector<16x128xf32>
    %220 = arith.truncf %219 : vector<16x128xf32> to vector<16x128xbf16>
    %c1_117 = arith.constant 1 : index
    %c0_118 = arith.constant 0 : index
    %c0_119 = arith.constant 0 : index
    %221 = vector.load %arg5[%c1_117, %c0_118, %c0_119] : memref<2x128x64xbf16, #tpu.memory_space<vmem>>, vector<1x128x64xbf16>
    %222 = vector.shape_cast %221 : vector<1x128x64xbf16> to vector<128x64xbf16>
    %cst_120 = arith.constant dense<0.000000e+00> : vector<16x64xf32>
    %223 = tpu.matmul %220, %222, %cst_120 {dimension_numbers = #tpu.dot_dimension_numbers<[1], [0], [0], [1], [0, 0, 1, 1], [], []>} : vector<16x128xbf16>, vector<128x64xbf16>, vector<16x64xf32> -> vector<16x64xf32>
    %c14 = arith.constant 14 : index
    %c0_121 = arith.constant 0 : index
    %c0_122 = arith.constant 0 : index
    %224 = vector.load %arg8[%c14, %c0_121, %c0_122] : memref<19x1x64xf32, #tpu.memory_space<vmem>>, vector<1x1x64xf32>
    %225 = vector.shape_cast %224 : vector<1x1x64xf32> to vector<1x64xf32>
    %226 = vector.broadcast %225 : vector<1x64xf32> to vector<16x64xf32>
    %227 = arith.addf %223, %226 : vector<16x64xf32>
    %228 = arith.addf %209, %227 : vector<16x64xf32>
    %c17 = arith.constant 17 : index
    %c0_123 = arith.constant 0 : index
    %c0_124 = arith.constant 0 : index
    %229 = vector.load %arg8[%c17, %c0_123, %c0_124] : memref<19x1x64xf32, #tpu.memory_space<vmem>>, vector<1x1x64xf32>
    %230 = vector.shape_cast %229 : vector<1x1x64xf32> to vector<1x64xf32>
    %c18 = arith.constant 18 : index
    %c0_125 = arith.constant 0 : index
    %c0_126 = arith.constant 0 : index
    %231 = vector.load %arg8[%c18, %c0_125, %c0_126] : memref<19x1x64xf32, #tpu.memory_space<vmem>>, vector<1x1x64xf32>
    %232 = vector.shape_cast %231 : vector<1x1x64xf32> to vector<1x64xf32>
    %cst_127 = arith.constant dense<0.000000e+00> : vector<16xf32>
    %233 = vector.multi_reduction <add>, %228, %cst_127 [1] : vector<16x64xf32> to vector<16xf32>
    %234 = vector.shape_cast %233 : vector<16xf32> to vector<16x1xf32>
    %cst_128 = arith.constant 6.400000e+01 : f32
    %235 = vector.broadcast %cst_128 : f32 to vector<16x1xf32>
    %236 = arith.divf %234, %235 : vector<16x1xf32>
    %237 = vector.broadcast %236 : vector<16x1xf32> to vector<16x64xf32>
    %238 = arith.subf %228, %237 : vector<16x64xf32>
    %239 = arith.mulf %238, %238 : vector<16x64xf32>
    %cst_129 = arith.constant dense<0.000000e+00> : vector<16xf32>
    %240 = vector.multi_reduction <add>, %239, %cst_129 [1] : vector<16x64xf32> to vector<16xf32>
    %241 = vector.shape_cast %240 : vector<16xf32> to vector<16x1xf32>
    %cst_130 = arith.constant 6.400000e+01 : f32
    %242 = vector.broadcast %cst_130 : f32 to vector<16x1xf32>
    %243 = arith.divf %241, %242 : vector<16x1xf32>
    %244 = vector.broadcast %236 : vector<16x1xf32> to vector<16x64xf32>
    %245 = arith.subf %228, %244 : vector<16x64xf32>
    %cst_131 = arith.constant 9.99999974E-6 : f32
    %246 = vector.broadcast %cst_131 : f32 to vector<16x1xf32>
    %247 = arith.addf %243, %246 : vector<16x1xf32>
    %248 = math.rsqrt %247 : vector<16x1xf32>
    %249 = vector.broadcast %248 : vector<16x1xf32> to vector<16x64xf32>
    %250 = arith.mulf %245, %249 : vector<16x64xf32>
    %251 = vector.broadcast %230 : vector<1x64xf32> to vector<16x64xf32>
    %252 = arith.mulf %250, %251 : vector<16x64xf32>
    %253 = vector.broadcast %232 : vector<1x64xf32> to vector<16x64xf32>
    %254 = arith.addf %252, %253 : vector<16x64xf32>
    %c0_132 = arith.constant 0 : index
    %c0_133 = arith.constant 0 : index
    %255 = vector.load %arg13[%c0_132, %c0_133] : memref<2x16xbf16, #tpu.memory_space<vmem>>, vector<2x16xbf16>
    %256 = arith.truncf %254 : vector<16x64xf32> to vector<16x64xbf16>
    %cst_134 = arith.constant dense<0.000000e+00> : vector<2x64xf32>
    %257 = tpu.matmul %255, %256, %cst_134 {dimension_numbers = #tpu.dot_dimension_numbers<[1], [0], [0], [1], [0, 0, 1, 1], [], []>} : vector<2x16xbf16>, vector<16x64xbf16>, vector<2x64xf32> -> vector<2x64xf32>
    %258 = arith.truncf %257 : vector<2x64xf32> to vector<2x64xbf16>
    %c0_135 = arith.constant 0 : index
    %c0_136 = arith.constant 0 : index
    %259 = vector.load %arg6[%c0_135, %c0_136] : memref<64x128xbf16, #tpu.memory_space<vmem>>, vector<64x128xbf16>
    %cst_137 = arith.constant dense<0.000000e+00> : vector<2x128xf32>
    %260 = tpu.matmul %258, %259, %cst_137 {dimension_numbers = #tpu.dot_dimension_numbers<[1], [0], [0], [1], [0, 0, 1, 1], [], []>} : vector<2x64xbf16>, vector<64x128xbf16>, vector<2x128xf32> -> vector<2x128xf32>
    %c2_138 = arith.constant 2 : index
    %c0_139 = arith.constant 0 : index
    %c0_140 = arith.constant 0 : index
    %261 = vector.load %arg9[%c2_138, %c0_139, %c0_140] : memref<3x1x128xf32, #tpu.memory_space<vmem>>, vector<1x1x128xf32>
    %262 = vector.shape_cast %261 : vector<1x1x128xf32> to vector<1x128xf32>
    %263 = vector.broadcast %262 : vector<1x128xf32> to vector<2x128xf32>
    %264 = arith.addf %260, %263 : vector<2x128xf32>
    %cst_141 = arith.constant 0.000000e+00 : f32
    %265 = vector.broadcast %cst_141 : f32 to vector<2x128xf32>
    %266 = arith.maximumf %264, %265 : vector<2x128xf32>
    %267 = arith.truncf %266 : vector<2x128xf32> to vector<2x128xbf16>
    %c0_142 = arith.constant 0 : index
    %c0_143 = arith.constant 0 : index
    %268 = vector.load %arg7[%c0_142, %c0_143] : memref<128x4xbf16, #tpu.memory_space<vmem>>, vector<128x4xbf16>
    %cst_144 = arith.constant dense<0.000000e+00> : vector<2x4xf32>
    %269 = tpu.matmul %267, %268, %cst_144 {dimension_numbers = #tpu.dot_dimension_numbers<[1], [0], [0], [1], [0, 0, 1, 1], [], []>} : vector<2x128xbf16>, vector<128x4xbf16>, vector<2x4xf32> -> vector<2x4xf32>
    %c0_145 = arith.constant 0 : index
    %c0_146 = arith.constant 0 : index
    %270 = vector.load %arg10[%c0_145, %c0_146] : memref<1x4xf32, #tpu.memory_space<vmem>>, vector<1x4xf32>
    %271 = vector.broadcast %270 : vector<1x4xf32> to vector<2x4xf32>
    %272 = arith.addf %269, %271 : vector<2x4xf32>
    %c0_147 = arith.constant 0 : index
    %c0_148 = arith.constant 0 : index
    %273 = vector.load %arg14[%c0_147, %c0_148] : memref<2x4xf32, #tpu.memory_space<vmem>>, vector<2x4xf32>
    tpu.vector_store %arg14[%c0_147, %c0_148], %272 {strides = array<i32>} : memref<2x4xf32, #tpu.memory_space<vmem>>, vector<2x4xf32>,
    return
  }
}

</mosaic_0001>

<llo_original>
// kernel: transformer_forward.1
$region0: #{transformer_forward.1}
  #allocation0 [shape = 'u32[]', space=smem, size = 0x4, offset = 0x4, fixed_abs, tag = 'smem constant byte address 0x4 - core index']
  #allocation1 [shape = 'u32[144,128]{1,0:T(1,128)}', space=vmem, size = 0x12000, scoped, tag = 'internal scratch']
  %s0 = inlined_call_operand.vmem [shape: f32[16,8], index: 0, kind: input, shape index: {}]
  %s1 = inlined_call_operand.hbm [shape: f32[16,64], index: 1, kind: input, shape index: {}]
  %s2 = inlined_call_operand.hbm [shape: bf16[8,64], index: 2, kind: input, shape index: {}]
  %s3 = inlined_call_operand.vmem [shape: bf16[8,64,64], index: 3, kind: input, shape index: {}]
  %s4 = inlined_call_operand.hbm [shape: bf16[2,64,128], index: 4, kind: input, shape index: {}]
  %s5 = inlined_call_operand.vmem [shape: bf16[2,128,64], index: 5, kind: input, shape index: {}]
  %s6 = inlined_call_operand.vmem [shape: bf16[64,128], index: 6, kind: input, shape index: {}]
  %s7 = inlined_call_operand.vmem [shape: bf16[128,4], index: 7, kind: input, shape index: {}]
  %s8 = inlined_call_operand.hbm [shape: f32[19,1,64], index: 8, kind: input, shape index: {}]
  %s9 = inlined_call_operand.vmem [shape: f32[3,1,128], index: 9, kind: input, shape index: {}]
  %s10 = inlined_call_operand.hbm [shape: f32[1,4], index: 10, kind: input, shape index: {}]
  %s11 = inlined_call_operand.hbm [shape: f32[16,64], index: 11, kind: input, shape index: {}]
  %s12 = inlined_call_operand.hbm [shape: f32[64,64], index: 12, kind: input, shape index: {}]
  %s13 = inlined_call_operand.hbm [shape: bf16[2,16], index: 13, kind: input, shape index: {}]
  %s14 = inlined_call_operand.hbm [shape: f32[2,4], index: 14, kind: output, shape index: {}]
  %s15 = sld [smem:[#allocation0]]
  $region98: #{transformer_forward.1} parent=0
    _
  %s17 = ssub.s32 1, %s15
  %s18 = scalar_select 0, %s17, %s15
  $region1: #{transformer_forward.1} parent=0
    #allocation2 [shape = 'u8[8192]{0}', space=vmem, size = 0x2000, scoped, tag = 'input window, operand 1, single buffered']
    #allocation3 [shape = 's32[1]{0}', space=sflag, size = 0x4, scoped, tag = 'scoped memory for transformer_forward.1']
    #allocation4 [shape = 's32[1]{0}', space=sflag, size = 0x4, scoped, tag = 'scoped memory for transformer_forward.1']
    #allocation5 [shape = 'u8[2048]{0}', space=vmem, size = 0x800, scoped, tag = 'input window, operand 2, single buffered']
    #allocation6 [shape = 's32[1]{0}', space=sflag, size = 0x4, scoped, tag = 'scoped memory for transformer_forward.1']
    #allocation7 [shape = 'u8[32768]{0}', space=vmem, size = 0x8000, scoped, tag = 'input window, operand 4, single buffered']
    #allocation8 [shape = 'u8[9728]{0}', space=vmem, size = 0x2800, scoped, tag = 'input window, operand 8, single buffered']
    #allocation9 [shape = 's32[1]{0}', space=sflag, size = 0x4, scoped, tag = 'scoped memory for transformer_forward.1']
    #allocation10 [shape = 'u8[512]{0}', space=vmem, size = 0x400, scoped, tag = 'input window, operand 10, single buffered']
    #allocation11 [shape = 'u8[8192]{0}', space=vmem, size = 0x2000, scoped, tag = 'input window, operand 11, single buffered']
    #allocation12 [shape = 's32[1]{0}', space=sflag, size = 0x4, scoped, tag = 'scoped memory for transformer_forward.1']
    #allocation13 [shape = 'u8[32768]{0}', space=vmem, size = 0x8000, scoped, tag = 'input window, operand 12, single buffered']
    #allocation14 [shape = 'u8[512]{0}', space=vmem, size = 0x400, scoped, tag = 'input window, operand 13, single buffered']
    #allocation15 [shape = 's32[1]{0}', space=sflag, size = 0x4, scoped, tag = 'scoped memory for transformer_forward.1']
    #allocation16 [shape = 'u8[1024]{0}', space=vmem, size = 0x400, scoped, tag = 'output window, operand 0, single buffered']
    %19 = vsyncpa [#allocation3], 0
    %20 = vsyncpa [#allocation6], 0
    %21 = vsyncpa [#allocation9], 0
    %22 = vsyncpa [#allocation12], 0
    %23 = vsyncpa [#allocation15], 0
    %24 = vsyncpa [#allocation4], 0
    // Predicated region
    $region2: #{transformer_forward.1} parent=1 // pred_check
      _
    $region3: #{transformer_forward.1} parent=1 // pred_check_branch
      %26 = sbr.rel (0) target = $region5
    $region4: #{transformer_forward.1} parent=1 // pred_region
      _
    $region5: #{transformer_forward.1} parent=1 // pred_fallthru
      _
    // Predicated region
    $region6: #{transformer_forward.1} parent=1 // pred_check
      _
    $region7: #{transformer_forward.1} parent=1 // pred_check_branch
      %28 = sbr.rel (0) target = $region9
    $region8: #{transformer_forward.1} parent=1 // pred_region
      %s30 = ssub.s32 256, 256
      %31 = vsyncadd [#allocation3], %s30
      %s32 = sshll.u32 [#allocation2], 4
      %s33 = int_to_ptr.vmem [resolvable:$true] %s32
      %38 = dma.hbm_to_vmem [thread:$0]  %s1, 256, %s33, [#allocation3], 128, 128, 8
    $region9: #{transformer_forward.1} parent=1 // pred_fallthru
      _
    // Predicated region
    $region10: #{transformer_forward.1} parent=1 // pred_check
      _
    $region11: #{transformer_forward.1} parent=1 // pred_check_branch
      %40 = sbr.rel (0) target = $region13
    $region12: #{transformer_forward.1} parent=1 // pred_region
      %s42 = ssub.s32 64, 64
      %43 = vsyncadd [#allocation6], %s42
      %s45 = sshll.u32 [#allocation5], 4
      %s46 = int_to_ptr.vmem [resolvable:$true] %s45
      %48 = dma.hbm_to_vmem [thread:$0]  %s2, 64, %s46, [#allocation6]
    $region13: #{transformer_forward.1} parent=1 // pred_fallthru
      _
    // Predicated region
    $region14: #{transformer_forward.1} parent=1 // pred_check
      _
    $region15: #{transformer_forward.1} parent=1 // pred_check_branch
      %50 = sbr.rel (0) target = $region17
    $region16: #{transformer_forward.1} parent=1 // pred_region
      _
    $region17: #{transformer_forward.1} parent=1 // pred_fallthru
      _
    // Predicated region
    $region18: #{transformer_forward.1} parent=1 // pred_check
      _
    $region19: #{transformer_forward.1} parent=1 // pred_check_branch
      %52 = sbr.rel (0) target = $region21
    $region20: #{transformer_forward.1} parent=1 // pred_region
      %s54 = ssub.s32 1024, 1024
      %55 = vsyncadd [#allocation6], %s54
      %s56 = sshll.u32 [#allocation7], 4
      %s57 = int_to_ptr.vmem [resolvable:$true] %s56
      %62 = dma.hbm_to_vmem [thread:$0]  %s4, 1024, %s57, [#allocation6], 64, 64, 4
    $region21: #{transformer_forward.1} parent=1 // pred_fallthru
      _
    // Predicated region
    $region22: #{transformer_forward.1} parent=1 // pred_check
      _
    $region23: #{transformer_forward.1} parent=1 // pred_check_branch
      %64 = sbr.rel (0) target = $region25
    $region24: #{transformer_forward.1} parent=1 // pred_region
      _
    $region25: #{transformer_forward.1} parent=1 // pred_fallthru
      _
    // Predicated region
    $region26: #{transformer_forward.1} parent=1 // pred_check
      _
    $region27: #{transformer_forward.1} parent=1 // pred_check_branch
      %66 = sbr.rel (0) target = $region29
    $region28: #{transformer_forward.1} parent=1 // pred_region
      _
    $region29: #{transformer_forward.1} parent=1 // pred_fallthru
      _
    // Predicated region
    $region30: #{transformer_forward.1} parent=1 // pred_check
      _
    $region31: #{transformer_forward.1} parent=1 // pred_check_branch
      %68 = sbr.rel (0) target = $region33
    $region32: #{transformer_forward.1} parent=1 // pred_region
      _
    $region33: #{transformer_forward.1} parent=1 // pred_fallthru
      _
    // Predicated region
    $region34: #{transformer_forward.1} parent=1 // pred_check
      _
    $region35: #{transformer_forward.1} parent=1 // pred_check_branch
      %70 = sbr.rel (0) target = $region37
    $region36: #{transformer_forward.1} parent=1 // pred_region
      %s72 = ssub.s32 304, 304
      %73 = vsyncadd [#allocation9], %s72
      %s74 = sshll.u32 [#allocation8], 4
      %s75 = int_to_ptr.vmem [resolvable:$true] %s74
      %80 = dma.hbm_to_vmem [thread:$0]  %s8, 304, %s75, [#allocation9], 16, 16, 1
    $region37: #{transformer_forward.1} parent=1 // pred_fallthru
      _
    // Predicated region
    $region38: #{transformer_forward.1} parent=1 // pred_check
      _
    $region39: #{transformer_forward.1} parent=1 // pred_check_branch
      %82 = sbr.rel (0) target = $region41
    $region40: #{transformer_forward.1} parent=1 // pred_region
      _
    $region41: #{transformer_forward.1} parent=1 // pred_fallthru
      _
    // Predicated region
    $region42: #{transformer_forward.1} parent=1 // pred_check
      _
    $region43: #{transformer_forward.1} parent=1 // pred_check_branch
      %84 = sbr.rel (0) target = $region45
    $region44: #{transformer_forward.1} parent=1 // pred_region
      %s86 = ssub.s32 16, 16
      %87 = vsyncadd [#allocation9], %s86
      %s89 = sshll.u32 [#allocation10], 4
      %s90 = int_to_ptr.vmem [resolvable:$true] %s89
      %92 = dma.hbm_to_vmem [thread:$0]  %s10, 16, %s90, [#allocation9]
    $region45: #{transformer_forward.1} parent=1 // pred_fallthru
      _
    // Predicated region
    $region46: #{transformer_forward.1} parent=1 // pred_check
      _
    $region47: #{transformer_forward.1} parent=1 // pred_check_branch
      %94 = sbr.rel (0) target = $region49
    $region48: #{transformer_forward.1} parent=1 // pred_region
      %s96 = ssub.s32 256, 256
      %97 = vsyncadd [#allocation12], %s96
      %s98 = sshll.u32 [#allocation11], 4
      %s99 = int_to_ptr.vmem [resolvable:$true] %s98
      %104 = dma.hbm_to_vmem [thread:$0]  %s11, 256, %s99, [#allocation12], 128, 128, 8
    $region49: #{transformer_forward.1} parent=1 // pred_fallthru
      _
    // Predicated region
    $region50: #{transformer_forward.1} parent=1 // pred_check
      _
    $region51: #{transformer_forward.1} parent=1 // pred_check_branch
      %106 = sbr.rel (0) target = $region53
    $region52: #{transformer_forward.1} parent=1 // pred_region
      %s108 = ssub.s32 1024, 1024
      %109 = vsyncadd [#allocation12], %s108
      %s110 = sshll.u32 [#allocation13], 4
      %s111 = int_to_ptr.vmem [resolvable:$true] %s110
      %116 = dma.hbm_to_vmem [thread:$0]  %s12, 1024, %s111, [#allocation12], 128, 128, 8
    $region53: #{transformer_forward.1} parent=1 // pred_fallthru
      _
    // Predicated region
    $region54: #{transformer_forward.1} parent=1 // pred_check
      _
    $region55: #{transformer_forward.1} parent=1 // pred_check_branch
      %118 = sbr.rel (0) target = $region57
    $region56: #{transformer_forward.1} parent=1 // pred_region
      %s120 = ssub.s32 16, 16
      %121 = vsyncadd [#allocation15], %s120
      %s123 = sshll.u32 [#allocation14], 4
      %s124 = int_to_ptr.vmem [resolvable:$true] %s123
      %126 = dma.hbm_to_vmem [thread:$0]  %s13, 16, %s124, [#allocation15]
    $region57: #{transformer_forward.1} parent=1 // pred_fallthru
      _
    // Predicated region
    $region58: #{transformer_forward.1} parent=1 // pred_check
      _
    $region59: #{transformer_forward.1} parent=1 // pred_check_branch
      %128 = sbr.rel (0) target = $region61
    $region60: #{transformer_forward.1} parent=1 // pred_region
      %129 = dma.done [#allocation3], 256
    $region61: #{transformer_forward.1} parent=1 // pred_fallthru
      _
    // Predicated region
    $region62: #{transformer_forward.1} parent=1 // pred_check
      _
    $region63: #{transformer_forward.1} parent=1 // pred_check_branch
      %131 = sbr.rel (0) target = $region65
    $region64: #{transformer_forward.1} parent=1 // pred_region
      %132 = dma.done [#allocation6], 64
    $region65: #{transformer_forward.1} parent=1 // pred_fallthru
      _
    // Predicated region
    $region66: #{transformer_forward.1} parent=1 // pred_check
      _
    $region67: #{transformer_forward.1} parent=1 // pred_check_branch
      %134 = sbr.rel (0) target = $region69
    $region68: #{transformer_forward.1} parent=1 // pred_region
      %135 = dma.done [#allocation6], 1024
    $region69: #{transformer_forward.1} parent=1 // pred_fallthru
      _
    // Predicated region
    $region70: #{transformer_forward.1} parent=1 // pred_check
      _
    $region71: #{transformer_forward.1} parent=1 // pred_check_branch
      %137 = sbr.rel (0) target = $region73
    $region72: #{transformer_forward.1} parent=1 // pred_region
      %138 = dma.done [#allocation9], 304
    $region73: #{transformer_forward.1} parent=1 // pred_fallthru
      _
    // Predicated region
    $region74: #{transformer_forward.1} parent=1 // pred_check
      _
    $region75: #{transformer_forward.1} parent=1 // pred_check_branch
      %140 = sbr.rel (0) target = $region77
    $region76: #{transformer_forward.1} parent=1 // pred_region
      %141 = dma.done [#allocation9], 16
    $region77: #{transformer_forward.1} parent=1 // pred_fallthru
      _
    // Predicated region
    $region78: #{transformer_forward.1} parent=1 // pred_check
      _
    $region79: #{transformer_forward.1} parent=1 // pred_check_branch
      %143 = sbr.rel (0) target = $region81
    $region80: #{transformer_forward.1} parent=1 // pred_region
      %144 = dma.done [#allocation12], 256
    $region81: #{transformer_forward.1} parent=1 // pred_fallthru
      _
    // Predicated region
    $region82: #{transformer_forward.1} parent=1 // pred_check
      _
    $region83: #{transformer_forward.1} parent=1 // pred_check_branch
      %146 = sbr.rel (0) target = $region85
    $region84: #{transformer_forward.1} parent=1 // pred_region
      %147 = dma.done [#allocation12], 1024
    $region85: #{transformer_forward.1} parent=1 // pred_fallthru
      _
    // Predicated region
    $region86: #{transformer_forward.1} parent=1 // pred_check
      _
    $region87: #{transformer_forward.1} parent=1 // pred_check_branch
      %149 = sbr.rel (0) target = $region89
    $region88: #{transformer_forward.1} parent=1 // pred_region
      %150 = dma.done [#allocation15], 16
    $region89: #{transformer_forward.1} parent=1 // pred_fallthru
      _
    %v152 = vld [vmem:[#allocation11] sm:$0xff]
    %v153 = vld [vmem:[#allocation11 + $0x8] sm:$0xff]
    %v154 = vld [vmem:[#allocation13] sm:$0xff]
    %v155 = vld [vmem:[#allocation13 + $0x8] sm:$0xff]
    %v156 = vld [vmem:[#allocation13 + $0x10] sm:$0xff]
    %v157 = vld [vmem:[#allocation13 + $0x18] sm:$0xff]
    %v158 = vld [vmem:[#allocation13 + $0x20] sm:$0xff]
    %v159 = vld [vmem:[#allocation13 + $0x28] sm:$0xff]
    %v160 = vld [vmem:[#allocation13 + $0x30] sm:$0xff]
    %v161 = vld [vmem:[#allocation13 + $0x38] sm:$0xff]
    %v162 = vpack.c.bf16 %v155, %v154
    %v163 = vpack.c.bf16 %v157, %v156
    %v164 = vpack.c.bf16 %v159, %v158
    %v165 = vpack.c.bf16 %v161, %v160
    %v166 = vld [vmem:[%s0] sm:$0xff]
    %v167 = vld [vmem:[%s0 + $0x8] sm:$0xff]
    %v168 = vpack.c.bf16 %v167, %v166
    %v169 = vld [vmem:[#allocation5] sm:$0xf]
    %v170 = vld [vmem:[#allocation8] sm:$0x1]
    %v172 = vlaneseq
    %v173 = vshrl.u32 %v172, 7
    %v174 = vsub.s32 0, %v173
    %v175 = vrot.slane %v170, %v174
    %vm177 = vcmask 64512
    %v179 = vsel %vm177, %v168, 0
    %vm181 = vcmask 1043456
    %v183 = vsel %vm181, %v169, 0
    %185 = vmatprep.subr.bf16.mxu0 0
    %186 = vmatpush1.bf16.msra.mxu0 %v183
    %187 = vmatprep.subr.bf16.mxu0 0
    %188 = vmatpush1.bf16.msra.mxu0 0
    %189 = vmatprep.subr.bf16.mxu0 0
    %190 = vmatpush1.bf16.msra.mxu0 0
    %191 = vmatprep.subr.bf16.mxu0 0
    %192 = vmatpush1.bf16.msra.mxu0 0
    %193 = vmatprep.subr.bf16.mxu0 0
    %194 = vmatpush1.bf16.msra.mxu0 0
    %195 = vmatprep.subr.bf16.mxu0 0
    %196 = vmatpush1.bf16.msra.mxu0 0
    %197 = vmatprep.subr.bf16.mxu0 0
    %198 = vmatpush1.bf16.msra.mxu0 0
    %199 = vmatprep.subr.bf16.mxu0 0
    %200 = vmatpush1.bf16.msra.mxu0 0
    %201 = vmatprep.subr.bf16.mxu0 0
    %202 = vmatpush1.bf16.msra.mxu0 0
    %203 = vmatprep.subr.bf16.mxu0 0
    %204 = vmatpush1.bf16.msra.mxu0 0
    %205 = vmatprep.subr.bf16.mxu0 0
    %206 = vmatpush1.bf16.msra.mxu0 0
    %207 = vmatprep.subr.bf16.mxu0 0
    %208 = vmatpush1.bf16.msra.mxu0 0
    %209 = vmatprep.subr.bf16.mxu0 0
    %210 = vmatpush1.bf16.msra.mxu0 0
    %211 = vmatprep.subr.bf16.mxu0 0
    %212 = vmatpush1.bf16.msra.mxu0 0
    %213 = vmatprep.subr.bf16.mxu0 0
    %214 = vmatpush1.bf16.msra.mxu0 0
    %215 = vmatprep.subr.bf16.mxu0 0
    %216 = vmatpush1.bf16.msra.mxu0 0
    %217 = vmatprep.mubr.bf16.mxu0 0
    %218 = vmatmul.mubr.bf16.gmra.mrb[0].mxu0 %v179
    %v219 = vpop.f32.mrb[0].mxu0
    %v220 = vadd.f32 %v175, %v219
    %v221 = vpop.f32.mrb[0].mxu0
    %v222 = vpop.f32.mrb[0].mxu0
    %v223 = vadd.f32 %v175, %v222
    %v224 = vpop.f32.mrb[0].mxu0
    %225 = vdwg.mxu0
    %v226 = vld [vmem:[#allocation2] sm:$0xff]
    %v227 = vld [vmem:[#allocation2 + $0x8] sm:$0xff]
    %v228 = vadd.f32 %v220, %v226
    %v229 = vadd.f32 %v223, %v227
    %v230 = vpack.c.bf16 %v229, %v228
    %v231 = vld [vmem:[%s3] sm:$0xf]
    %v232 = vld [vmem:[%s3 + $0x4] sm:$0xf]
    %v233 = vld [vmem:[%s3 + $0x8] sm:$0xf]
    %v234 = vld [vmem:[%s3 + $0xc] sm:$0xf]
    %v235 = vld [vmem:[%s3 + $0x10] sm:$0xf]
    %v236 = vld [vmem:[%s3 + $0x14] sm:$0xf]
    %v237 = vld [vmem:[%s3 + $0x18] sm:$0xf]
    %v238 = vld [vmem:[%s3 + $0x1c] sm:$0xf]
    %s239 = scalar_lea.vmem [#allocation8], 1
    %v240 = vld [vmem:[%s239] sm:$0x1]
    %v242 = vlaneseq
    %v243 = vshrl.u32 %v242, 7
    %v244 = vsub.s32 0, %v243
    %v245 = vrot.slane %v240, %v244
    %v255 = vunpack.c.l.b16 %v231
    %v256 = vunpack.c.l.b16 %v232
    %v257 = vunpack.c.l.b16 %v233
    %v258 = vunpack.c.l.b16 %v234
    %v259 = vunpack.c.l.b16 %v235
    %v260 = vunpack.c.l.b16 %v236
    %v261 = vunpack.c.l.b16 %v237
    %v262 = vunpack.c.l.b16 %v238
    %v263 = vpack.c.b16 %v256, %v255
    %v264 = vpack.c.b16 %v258, %v257
    %v265 = vpack.c.b16 %v260, %v259
    %v266 = vpack.c.b16 %v262, %v261
    %vm271 = vcmask 523264
    %v273 = vsel %vm271, %v230, 0
    %275 = vmatprep.subr.bf16.mxu0 0
    %276 = vmatpush1.bf16.msra.mxu0 %v263
    %277 = vmatprep.subr.bf16.mxu0 0
    %278 = vmatpush1.bf16.msra.mxu0 %v264
    %279 = vmatprep.subr.bf16.mxu0 0
    %280 = vmatpush1.bf16.msra.mxu0 %v265
    %281 = vmatprep.subr.bf16.mxu0 0
    %282 = vmatpush1.bf16.msra.mxu0 %v266
    %283 = vmatprep.subr.bf16.mxu0 0
    %284 = vmatpush1.bf16.msra.mxu0 0
    %285 = vmatprep.subr.bf16.mxu0 0
    %286 = vmatpush1.bf16.msra.mxu0 0
    %287 = vmatprep.subr.bf16.mxu0 0
    %288 = vmatpush1.bf16.msra.mxu0 0
    %289 = vmatprep.subr.bf16.mxu0 0
    %290 = vmatpush1.bf16.msra.mxu0 0
    %291 = vmatprep.subr.bf16.mxu0 0
    %292 = vmatpush1.bf16.msra.mxu0 0
    %293 = vmatprep.subr.bf16.mxu0 0
    %294 = vmatpush1.bf16.msra.mxu0 0
    %295 = vmatprep.subr.bf16.mxu0 0
    %296 = vmatpush1.bf16.msra.mxu0 0
    %297 = vmatprep.subr.bf16.mxu0 0
    %298 = vmatpush1.bf16.msra.mxu0 0
    %299 = vmatprep.subr.bf16.mxu0 0
    %300 = vmatpush1.bf16.msra.mxu0 0
    %301 = vmatprep.subr.bf16.mxu0 0
    %302 = vmatpush1.bf16.msra.mxu0 0
    %303 = vmatprep.subr.bf16.mxu0 0
    %304 = vmatpush1.bf16.msra.mxu0 0
    %305 = vmatprep.subr.bf16.mxu0 0
    %306 = vmatpush1.bf16.msra.mxu0 0
    %307 = vmatprep.mubr.bf16.mxu0 0
    %308 = vmatmul.mubr.bf16.gmra.mrb[0].mxu0 %v273
    %v309 = vpop.f32.mrb[0].mxu0
    %v310 = vadd.f32 %v245, %v309
    %v311 = vpop.f32.mrb[0].mxu0
    %v312 = vpop.f32.mrb[0].mxu0
    %v313 = vadd.f32 %v245, %v312
    %v314 = vpop.f32.mrb[0].mxu0
    %315 = vdwg.mxu0
    %s316 = scalar_lea.vmem %s3, 32
    %v317 = vld [vmem:[%s316] sm:$0xf]
    %v318 = vld [vmem:[%s316 + $0x4] sm:$0xf]
    %v319 = vld [vmem:[%s316 + $0x8] sm:$0xf]
    %v320 = vld [vmem:[%s316 + $0xc] sm:$0xf]
    %v321 = vld [vmem:[%s316 + $0x10] sm:$0xf]
    %v322 = vld [vmem:[%s316 + $0x14] sm:$0xf]
    %v323 = vld [vmem:[%s316 + $0x18] sm:$0xf]
    %v324 = vld [vmem:[%s316 + $0x1c] sm:$0xf]
    %s325 = scalar_lea.vmem [#allocation8], 2
    %v326 = vld [vmem:[%s325] sm:$0x1]
    %v328 = vlaneseq
    %v329 = vshrl.u32 %v328, 7
    %v330 = vsub.s32 0, %v329
    %v331 = vrot.slane %v326, %v330
    %v341 = vunpack.c.l.b16 %v317
    %v342 = vunpack.c.l.b16 %v318
    %v343 = vunpack.c.l.b16 %v319
    %v344 = vunpack.c.l.b16 %v320
    %v345 = vunpack.c.l.b16 %v321
    %v346 = vunpack.c.l.b16 %v322
    %v347 = vunpack.c.l.b16 %v323
    %v348 = vunpack.c.l.b16 %v324
    %v349 = vpack.c.b16 %v342, %v341
    %v350 = vpack.c.b16 %v344, %v343
    %v351 = vpack.c.b16 %v346, %v345
    %v352 = vpack.c.b16 %v348, %v347
    %357 = vmatprep.subr.bf16.mxu0 0
    %358 = vmatpush1.bf16.msra.mxu0 %v349
    %359 = vmatprep.subr.bf16.mxu0 0
    %360 = vmatpush1.bf16.msra.mxu0 %v350
    %361 = vmatprep.subr.bf16.mxu0 0
    %362 = vmatpush1.bf16.msra.mxu0 %v351
    %363 = vmatprep.subr.bf16.mxu0 0
    %364 = vmatpush1.bf16.msra.mxu0 %v352
    %365 = vmatprep.subr.bf16.mxu0 0
    %366 = vmatpush1.bf16.msra.mxu0 0
    %367 = vmatprep.subr.bf16.mxu0 0
    %368 = vmatpush1.bf16.msra.mxu0 0
    %369 = vmatprep.subr.bf16.mxu0 0
    %370 = vmatpush1.bf16.msra.mxu0 0
    %371 = vmatprep.subr.bf16.mxu0 0
    %372 = vmatpush1.bf16.msra.mxu0 0
    %373 = vmatprep.subr.bf16.mxu0 0
    %374 = vmatpush1.bf16.msra.mxu0 0
    %375 = vmatprep.subr.bf16.mxu0 0
    %376 = vmatpush1.bf16.msra.mxu0 0
    %377 = vmatprep.subr.bf16.mxu0 0
    %378 = vmatpush1.bf16.msra.mxu0 0
    %379 = vmatprep.subr.bf16.mxu0 0
    %380 = vmatpush1.bf16.msra.mxu0 0
    %381 = vmatprep.subr.bf16.mxu0 0
    %382 = vmatpush1.bf16.msra.mxu0 0
    %383 = vmatprep.subr.bf16.mxu0 0
    %384 = vmatpush1.bf16.msra.mxu0 0
    %385 = vmatprep.subr.bf16.mxu0 0
    %386 = vmatpush1.bf16.msra.mxu0 0
    %387 = vmatprep.subr.bf16.mxu0 0
    %388 = vmatpush1.bf16.msra.mxu0 0
    %389 = vmatprep.mubr.bf16.mxu0 0
    %390 = vmatmul.mubr.bf16.gmra.mrb[0].mxu0 %v273
    %v391 = vpop.f32.mrb[0].mxu0
    %v392 = vadd.f32 %v331, %v391
    %v393 = vpop.f32.mrb[0].mxu0
    %v394 = vpop.f32.mrb[0].mxu0
    %v395 = vadd.f32 %v331, %v394
    %v396 = vpop.f32.mrb[0].mxu0
    %397 = vdwg.mxu0
    %s398 = scalar_lea.vmem %s3, 64
    %v399 = vld [vmem:[%s398] sm:$0xf]
    %v400 = vld [vmem:[%s398 + $0x4] sm:$0xf]
    %v401 = vld [vmem:[%s398 + $0x8] sm:$0xf]
    %v402 = vld [vmem:[%s398 + $0xc] sm:$0xf]
    %v403 = vld [vmem:[%s398 + $0x10] sm:$0xf]
    %v404 = vld [vmem:[%s398 + $0x14] sm:$0xf]
    %v405 = vld [vmem:[%s398 + $0x18] sm:$0xf]
    %v406 = vld [vmem:[%s398 + $0x1c] sm:$0xf]
    %s407 = scalar_lea.vmem [#allocation8], 3
    %v408 = vld [vmem:[%s407] sm:$0x1]
    %v410 = vlaneseq
    %v411 = vshrl.u32 %v410, 7
    %v412 = vsub.s32 0, %v411
    %v413 = vrot.slane %v408, %v412
    %v423 = vunpack.c.l.b16 %v399
    %v424 = vunpack.c.l.b16 %v400
    %v425 = vunpack.c.l.b16 %v401
    %v426 = vunpack.c.l.b16 %v402
    %v427 = vunpack.c.l.b16 %v403
    %v428 = vunpack.c.l.b16 %v404
    %v429 = vunpack.c.l.b16 %v405
    %v430 = vunpack.c.l.b16 %v406
    %v431 = vpack.c.b16 %v424, %v423
    %v432 = vpack.c.b16 %v426, %v425
    %v433 = vpack.c.b16 %v428, %v427
    %v434 = vpack.c.b16 %v430, %v429
    %439 = vmatprep.subr.bf16.mxu0 0
    %440 = vmatpush1.bf16.msra.mxu0 %v431
    %441 = vmatprep.subr.bf16.mxu0 0
    %442 = vmatpush1.bf16.msra.mxu0 %v432
    %443 = vmatprep.subr.bf16.mxu0 0
    %444 = vmatpush1.bf16.msra.mxu0 %v433
    %445 = vmatprep.subr.bf16.mxu0 0
    %446 = vmatpush1.bf16.msra.mxu0 %v434
    %447 = vmatprep.subr.bf16.mxu0 0
    %448 = vmatpush1.bf16.msra.mxu0 0
    %449 = vmatprep.subr.bf16.mxu0 0
    %450 = vmatpush1.bf16.msra.mxu0 0
    %451 = vmatprep.subr.bf16.mxu0 0
    %452 = vmatpush1.bf16.msra.mxu0 0
    %453 = vmatprep.subr.bf16.mxu0 0
    %454 = vmatpush1.bf16.msra.mxu0 0
    %455 = vmatprep.subr.bf16.mxu0 0
    %456 = vmatpush1.bf16.msra.mxu0 0
    %457 = vmatprep.subr.bf16.mxu0 0
    %458 = vmatpush1.bf16.msra.mxu0 0
    %459 = vmatprep.subr.bf16.mxu0 0
    %460 = vmatpush1.bf16.msra.mxu0 0
    %461 = vmatprep.subr.bf16.mxu0 0
    %462 = vmatpush1.bf16.msra.mxu0 0
    %463 = vmatprep.subr.bf16.mxu0 0
    %464 = vmatpush1.bf16.msra.mxu0 0
    %465 = vmatprep.subr.bf16.mxu0 0
    %466 = vmatpush1.bf16.msra.mxu0 0
    %467 = vmatprep.subr.bf16.mxu0 0
    %468 = vmatpush1.bf16.msra.mxu0 0
    %469 = vmatprep.subr.bf16.mxu0 0
    %470 = vmatpush1.bf16.msra.mxu0 0
    %471 = vmatprep.mubr.bf16.mxu0 0
    %472 = vmatmul.mubr.bf16.gmra.mrb[0].mxu0 %v273
    %v473 = vpop.f32.mrb[0].mxu0
    %v474 = vadd.f32 %v413, %v473
    %v475 = vpop.f32.mrb[0].mxu0
    %v476 = vpop.f32.mrb[0].mxu0
    %v477 = vadd.f32 %v413, %v476
    %v478 = vpop.f32.mrb[0].mxu0
    %479 = vdwg.mxu0
    %v480 = vmul.f32 %v392, %v154
    %v481 = vmul.f32 %v395, %v155
    %v482 = vmul.f32 %v392, %v156
    %v483 = vmul.f32 %v395, %v157
    %v484 = vmul.f32 %v392, %v158
    %v485 = vmul.f32 %v395, %v159
    %v486 = vmul.f32 %v392, %v160
    %v487 = vmul.f32 %v395, %v161
    %v488 = vpack.c.bf16 %v481, %v480
    %v489 = vpack.c.bf16 %v483, %v482
    %v490 = vpack.c.bf16 %v485, %v484
    %v491 = vpack.c.bf16 %v487, %v486
    %v492 = vmul.f32 %v474, %v154
    %v493 = vmul.f32 %v477, %v155
    %v494 = vmul.f32 %v474, %v156
    %v495 = vmul.f32 %v477, %v157
    %v496 = vmul.f32 %v474, %v158
    %v497 = vmul.f32 %v477, %v159
    %v498 = vmul.f32 %v474, %v160
    %v499 = vmul.f32 %v477, %v161
    %v500 = vpack.c.bf16 %v493, %v492
    %v501 = vpack.c.bf16 %v495, %v494
    %v502 = vpack.c.bf16 %v497, %v496
    %v503 = vpack.c.bf16 %v499, %v498
    %v504 = vpack.c.bf16 %v313, %v310
    %v506 = vsel %vm271, %v504, 0
    %v509 = vsel %vm271, %v488, 0
    %v512 = vsel %vm271, %v489, 0
    %v515 = vsel %vm271, %v490, 0
    %v518 = vsel %vm271, %v491, 0
    %520 = vmatprep.subr.bf16.mxu0 0
    %521 = vmatpush1.bf16.xpose.msra.mxu0 %v509
    %522 = vmatprep.subr.bf16.mxu0 0
    %523 = vmatpush1.bf16.xpose.msra.mxu0 %v512
    %524 = vmatprep.subr.bf16.mxu0 0
    %525 = vmatpush1.bf16.xpose.msra.mxu0 %v515
    %526 = vmatprep.subr.bf16.mxu0 0
    %527 = vmatpush1.bf16.xpose.msra.mxu0 %v518
    %528 = vmatprep.subr.bf16.mxu0 0
    %529 = vmatpush1.bf16.xpose.msra.mxu0 0
    %530 = vmatprep.subr.bf16.mxu0 0
    %531 = vmatpush1.bf16.xpose.msra.mxu0 0
    %532 = vmatprep.subr.bf16.mxu0 0
    %533 = vmatpush1.bf16.xpose.msra.mxu0 0
    %534 = vmatprep.subr.bf16.mxu0 0
    %535 = vmatpush1.bf16.xpose.msra.mxu0 0
    %536 = vmatprep.subr.bf16.mxu0 0
    %537 = vmatpush1.bf16.xpose.msra.mxu0 0
    %538 = vmatprep.subr.bf16.mxu0 0
    %539 = vmatpush1.bf16.xpose.msra.mxu0 0
    %540 = vmatprep.subr.bf16.mxu0 0
    %541 = vmatpush1.bf16.xpose.msra.mxu0 0
    %542 = vmatprep.subr.bf16.mxu0 0
    %543 = vmatpush1.bf16.xpose.msra.mxu0 0
    %544 = vmatprep.subr.bf16.mxu0 0
    %545 = vmatpush1.bf16.xpose.msra.mxu0 0
    %546 = vmatprep.subr.bf16.mxu0 0
    %547 = vmatpush1.bf16.xpose.msra.mxu0 0
    %548 = vmatprep.subr.bf16.mxu0 0
    %549 = vmatpush1.bf16.xpose.msra.mxu0 0
    %550 = vmatprep.subr.bf16.mxu0 0
    %551 = vmatpush1.bf16.xpose.msra.mxu0 0
    %552 = vmatprep.mubr.bf16.mxu0 0
    %553 = vmatmul.mubr.bf16.gmra.mrb[0].mxu0 %v506
    %v554 = vpop.f32.mrb[0].mxu0
    %v555 = vadd.f32 %v152, %v554
    %v556 = vpop.f32.mrb[0].mxu0
    %v557 = vpop.f32.mrb[0].mxu0
    %v558 = vadd.f32 %v153, %v557
    %v559 = vpop.f32.mrb[0].mxu0
    %560 = vdwg.mxu0
    %v561 = vsel %vm271, %v555, -inf
    %562 = vmax.xlane.f32.xlu0 %v561
    %v563 = vpop.xlane.xlu0 %562
    %v564 = vsel %vm271, %v558, -inf
    %565 = vmax.xlane.f32.xlu0 %v564
    %v566 = vpop.xlane.xlu0 %565
    %v567 = vsub.f32 %v555, %v563
    %v568 = vsub.f32 %v558, %v566
    %v569 = vmul.f32 %v567, 1.442695
    %v570 = vpow.pop %v569
    %v571 = vmul.f32 %v568, 1.442695
    %v572 = vpow.pop %v571
    %v573 = vpack.c.bf16 %v572, %v570
    %v575 = vsel %vm271, %v573, 0
    %577 = vmatprep.subr.bf16.mxu0 0
    %578 = vmatpush1.bf16.msra.mxu0 %v500
    %579 = vmatprep.subr.bf16.mxu0 0
    %580 = vmatpush1.bf16.msra.mxu0 %v501
    %581 = vmatprep.subr.bf16.mxu0 0
    %582 = vmatpush1.bf16.msra.mxu0 %v502
    %583 = vmatprep.subr.bf16.mxu0 0
    %584 = vmatpush1.bf16.msra.mxu0 %v503
    %585 = vmatprep.subr.bf16.mxu0 0
    %586 = vmatpush1.bf16.msra.mxu0 0
    %587 = vmatprep.subr.bf16.mxu0 0
    %588 = vmatpush1.bf16.msra.mxu0 0
    %589 = vmatprep.subr.bf16.mxu0 0
    %590 = vmatpush1.bf16.msra.mxu0 0
    %591 = vmatprep.subr.bf16.mxu0 0
    %592 = vmatpush1.bf16.msra.mxu0 0
    %593 = vmatprep.subr.bf16.mxu0 0
    %594 = vmatpush1.bf16.msra.mxu0 0
    %595 = vmatprep.subr.bf16.mxu0 0
    %596 = vmatpush1.bf16.msra.mxu0 0
    %597 = vmatprep.subr.bf16.mxu0 0
    %598 = vmatpush1.bf16.msra.mxu0 0
    %599 = vmatprep.subr.bf16.mxu0 0
    %600 = vmatpush1.bf16.msra.mxu0 0
    %601 = vmatprep.subr.bf16.mxu0 0
    %602 = vmatpush1.bf16.msra.mxu0 0
    %603 = vmatprep.subr.bf16.mxu0 0
    %604 = vmatpush1.bf16.msra.mxu0 0
    %605 = vmatprep.subr.bf16.mxu0 0
    %606 = vmatpush1.bf16.msra.mxu0 0
    %607 = vmatprep.subr.bf16.mxu0 0
    %608 = vmatpush1.bf16.msra.mxu0 0
    %609 = vmatprep.mubr.bf16.mxu0 0
    %610 = vmatmul.mubr.bf16.gmra.mrb[0].mxu0 %v575
    %v611 = vpop.f32.mrb[0].mxu0
    %v612 = vadd.f32 0.0, %v611
    %v613 = vpop.f32.mrb[0].mxu0
    %v614 = vpop.f32.mrb[0].mxu0
    %v615 = vadd.f32 0.0, %v614
    %v616 = vpop.f32.mrb[0].mxu0
    %617 = vdwg.mxu0
    %618 = vmatprep.subr.bf16.mxu0 0
    %619 = vmatpush1.bf16.msra.mxu0 %v162
    %620 = vmatprep.subr.bf16.mxu0 0
    %621 = vmatpush1.bf16.msra.mxu0 %v163
    %622 = vmatprep.subr.bf16.mxu0 0
    %623 = vmatpush1.bf16.msra.mxu0 %v164
    %624 = vmatprep.subr.bf16.mxu0 0
    %625 = vmatpush1.bf16.msra.mxu0 %v165
    %626 = vmatprep.subr.bf16.mxu0 0
    %627 = vmatpush1.bf16.msra.mxu0 0
    %628 = vmatprep.subr.bf16.mxu0 0
    %629 = vmatpush1.bf16.msra.mxu0 0
    %630 = vmatprep.subr.bf16.mxu0 0
    %631 = vmatpush1.bf16.msra.mxu0 0
    %632 = vmatprep.subr.bf16.mxu0 0
    %633 = vmatpush1.bf16.msra.mxu0 0
    %634 = vmatprep.subr.bf16.mxu0 0
    %635 = vmatpush1.bf16.msra.mxu0 0
    %636 = vmatprep.subr.bf16.mxu0 0
    %637 = vmatpush1.bf16.msra.mxu0 0
    %638 = vmatprep.subr.bf16.mxu0 0
    %639 = vmatpush1.bf16.msra.mxu0 0
    %640 = vmatprep.subr.bf16.mxu0 0
    %641 = vmatpush1.bf16.msra.mxu0 0
    %642 = vmatprep.subr.bf16.mxu0 0
    %643 = vmatpush1.bf16.msra.mxu0 0
    %644 = vmatprep.subr.bf16.mxu0 0
    %645 = vmatpush1.bf16.msra.mxu0 0
    %646 = vmatprep.subr.bf16.mxu0 0
    %647 = vmatpush1.bf16.msra.mxu0 0
    %648 = vmatprep.subr.bf16.mxu0 0
    %649 = vmatpush1.bf16.msra.mxu0 0
    %650 = vmatprep.mubr.bf16.mxu0 0
    %651 = vmatmul.mubr.bf16.gmra.mrb[0].mxu0 %v575
    %v652 = vpop.f32.mrb[0].mxu0
    %v653 = vadd.f32 0.0, %v652
    %v654 = vpop.f32.mrb[0].mxu0
    %v655 = vpop.f32.mrb[0].mxu0
    %v656 = vadd.f32 0.0, %v655
    %v657 = vpop.f32.mrb[0].mxu0
    %658 = vdwg.mxu0
    %v659 = vrcp.pop %v653
    %v660 = vrcp.pop %v656
    %v661 = vmul.f32 %v612, %v659
    %v662 = vmul.f32 %v615, %v660
    %v663 = vpack.c.bf16 %v662, %v661
    %s664 = scalar_lea.vmem %s3, 96
    %v665 = vld [vmem:[%s664] sm:$0xf]
    %v666 = vld [vmem:[%s664 + $0x4] sm:$0xf]
    %v667 = vld [vmem:[%s664 + $0x8] sm:$0xf]
    %v668 = vld [vmem:[%s664 + $0xc] sm:$0xf]
    %v669 = vld [vmem:[%s664 + $0x10] sm:$0xf]
    %v670 = vld [vmem:[%s664 + $0x14] sm:$0xf]
    %v671 = vld [vmem:[%s664 + $0x18] sm:$0xf]
    %v672 = vld [vmem:[%s664 + $0x1c] sm:$0xf]
    %s673 = scalar_lea.vmem [#allocation8], 4
    %v674 = vld [vmem:[%s673] sm:$0x1]
    %v676 = vlaneseq
    %v677 = vshrl.u32 %v676, 7
    %v678 = vsub.s32 0, %v677
    %v679 = vrot.slane %v674, %v678
    %v689 = vunpack.c.l.b16 %v665
    %v690 = vunpack.c.l.b16 %v666
    %v691 = vunpack.c.l.b16 %v667
    %v692 = vunpack.c.l.b16 %v668
    %v693 = vunpack.c.l.b16 %v669
    %v694 = vunpack.c.l.b16 %v670
    %v695 = vunpack.c.l.b16 %v671
    %v696 = vunpack.c.l.b16 %v672
    %v697 = vpack.c.b16 %v690, %v689
    %v698 = vpack.c.b16 %v692, %v691
    %v699 = vpack.c.b16 %v694, %v693
    %v700 = vpack.c.b16 %v696, %v695
    %v706 = vsel %vm271, %v663, 0
    %708 = vmatprep.subr.bf16.mxu0 0
    %709 = vmatpush1.bf16.msra.mxu0 %v697
    %710 = vmatprep.subr.bf16.mxu0 0
    %711 = vmatpush1.bf16.msra.mxu0 %v698
    %712 = vmatprep.subr.bf16.mxu0 0
    %713 = vmatpush1.bf16.msra.mxu0 %v699
    %714 = vmatprep.subr.bf16.mxu0 0
    %715 = vmatpush1.bf16.msra.mxu0 %v700
    %716 = vmatprep.subr.bf16.mxu0 0
    %717 = vmatpush1.bf16.msra.mxu0 0
    %718 = vmatprep.subr.bf16.mxu0 0
    %719 = vmatpush1.bf16.msra.mxu0 0
    %720 = vmatprep.subr.bf16.mxu0 0
    %721 = vmatpush1.bf16.msra.mxu0 0
    %722 = vmatprep.subr.bf16.mxu0 0
    %723 = vmatpush1.bf16.msra.mxu0 0
    %724 = vmatprep.subr.bf16.mxu0 0
    %725 = vmatpush1.bf16.msra.mxu0 0
    %726 = vmatprep.subr.bf16.mxu0 0
    %727 = vmatpush1.bf16.msra.mxu0 0
    %728 = vmatprep.subr.bf16.mxu0 0
    %729 = vmatpush1.bf16.msra.mxu0 0
    %730 = vmatprep.subr.bf16.mxu0 0
    %731 = vmatpush1.bf16.msra.mxu0 0
    %732 = vmatprep.subr.bf16.mxu0 0
    %733 = vmatpush1.bf16.msra.mxu0 0
    %734 = vmatprep.subr.bf16.mxu0 0
    %735 = vmatpush1.bf16.msra.mxu0 0
    %736 = vmatprep.subr.bf16.mxu0 0
    %737 = vmatpush1.bf16.msra.mxu0 0
    %738 = vmatprep.subr.bf16.mxu0 0
    %739 = vmatpush1.bf16.msra.mxu0 0
    %740 = vmatprep.mubr.bf16.mxu0 0
    %741 = vmatmul.mubr.bf16.gmra.mrb[0].mxu0 %v706
    %v742 = vpop.f32.mrb[0].mxu0
    %v743 = vadd.f32 %v679, %v742
    %v744 = vpop.f32.mrb[0].mxu0
    %v745 = vpop.f32.mrb[0].mxu0
    %v746 = vadd.f32 %v679, %v745
    %v747 = vpop.f32.mrb[0].mxu0
    %748 = vdwg.mxu0
    %v749 = vadd.f32 %v228, %v743
    %v750 = vadd.f32 %v229, %v746
    %s751 = scalar_lea.vmem [#allocation8], 6
    %v752 = vld [vmem:[%s751] sm:$0x1]
    %s753 = scalar_lea.vmem [#allocation8], 7
    %v754 = vld [vmem:[%s753] sm:$0x1]
    %v755 = vsel %vm271, %v749, 0.0
    %756 = vadd.xlane.f32.xlu0 %v755
    %v757 = vpop.xlane.xlu0 %756
    %v758 = vsel %vm271, %v750, 0.0
    %759 = vadd.xlane.f32.xlu0 %v758
    %v760 = vpop.xlane.xlu0 %759
    %v761 = vrcp.pop 64.0
    %v762 = vmul.f32 %v757, %v761
    %v763 = vmul.f32 %v760, %v761
    %v764 = vsub.f32 %v749, %v762
    %v765 = vsub.f32 %v750, %v763
    %v766 = vmul.f32 %v764, %v764
    %v767 = vmul.f32 %v765, %v765
    %v768 = vsel %vm271, %v766, 0.0
    %769 = vadd.xlane.f32.xlu0 %v768
    %v770 = vpop.xlane.xlu0 %769
    %v771 = vsel %vm271, %v767, 0.0
    %772 = vadd.xlane.f32.xlu0 %v771
    %v773 = vpop.xlane.xlu0 %772
    %v774 = vmul.f32 %v770, %v761
    %v775 = vmul.f32 %v773, %v761
    %v776 = vadd.f32 %v774, 1e-05
    %v777 = vadd.f32 %v775, 1e-05
    %v778 = vrsqrt.pop %v776
    %v779 = vrsqrt.pop %v777
    %v780 = vmul.f32 %v764, %v778
    %v781 = vmul.f32 %v765, %v779
    %v783 = vlaneseq
    %v784 = vshrl.u32 %v783, 7
    %v785 = vsub.s32 0, %v784
    %v786 = vrot.slane %v752, %v785
    %v788 = vmul.f32 %v780, %v786
    %v789 = vmul.f32 %v781, %v786
    %v791 = vlaneseq
    %v792 = vshrl.u32 %v791, 7
    %v793 = vsub.s32 0, %v792
    %v794 = vrot.slane %v754, %v793
    %v796 = vadd.f32 %v788, %v794
    %v797 = vadd.f32 %v789, %v794
    %v798 = vpack.c.bf16 %v797, %v796
    %v799 = vld [vmem:[#allocation7] sm:$0xf]
    %v800 = vld [vmem:[#allocation7 + $0x4] sm:$0xf]
    %v801 = vld [vmem:[#allocation7 + $0x8] sm:$0xf]
    %v802 = vld [vmem:[#allocation7 + $0xc] sm:$0xf]
    %v803 = vld [vmem:[#allocation7 + $0x10] sm:$0xf]
    %v804 = vld [vmem:[#allocation7 + $0x14] sm:$0xf]
    %v805 = vld [vmem:[#allocation7 + $0x18] sm:$0xf]
    %v806 = vld [vmem:[#allocation7 + $0x1c] sm:$0xf]
    %v807 = vld [vmem:[%s9] sm:$0x1]
    %v809 = vlaneseq
    %v810 = vshrl.u32 %v809, 7
    %v811 = vsub.s32 0, %v810
    %v812 = vrot.slane %v807, %v811
    %v822 = vunpack.c.l.b16 %v799
    %v823 = vunpack.c.l.b16 %v800
    %v824 = vunpack.c.l.b16 %v801
    %v825 = vunpack.c.l.b16 %v802
    %v826 = vunpack.c.l.b16 %v803
    %v827 = vunpack.c.l.b16 %v804
    %v828 = vunpack.c.l.b16 %v805
    %v829 = vunpack.c.l.b16 %v806
    %v830 = vpack.c.b16 %v823, %v822
    %v831 = vpack.c.b16 %v825, %v824
    %v832 = vpack.c.b16 %v827, %v826
    %v833 = vpack.c.b16 %v829, %v828
    %v839 = vsel %vm271, %v798, 0
    %841 = vmatprep.subr.bf16.mxu0 0
    %842 = vmatpush1.bf16.msra.mxu0 %v830
    %843 = vmatprep.subr.bf16.mxu0 0
    %844 = vmatpush1.bf16.msra.mxu0 %v831
    %845 = vmatprep.subr.bf16.mxu0 0
    %846 = vmatpush1.bf16.msra.mxu0 %v832
    %847 = vmatprep.subr.bf16.mxu0 0
    %848 = vmatpush1.bf16.msra.mxu0 %v833
    %849 = vmatprep.subr.bf16.mxu0 0
    %850 = vmatpush1.bf16.msra.mxu0 0
    %851 = vmatprep.subr.bf16.mxu0 0
    %852 = vmatpush1.bf16.msra.mxu0 0
    %853 = vmatprep.subr.bf16.mxu0 0
    %854 = vmatpush1.bf16.msra.mxu0 0
    %855 = vmatprep.subr.bf16.mxu0 0
    %856 = vmatpush1.bf16.msra.mxu0 0
    %857 = vmatprep.subr.bf16.mxu0 0
    %858 = vmatpush1.bf16.msra.mxu0 0
    %859 = vmatprep.subr.bf16.mxu0 0
    %860 = vmatpush1.bf16.msra.mxu0 0
    %861 = vmatprep.subr.bf16.mxu0 0
    %862 = vmatpush1.bf16.msra.mxu0 0
    %863 = vmatprep.subr.bf16.mxu0 0
    %864 = vmatpush1.bf16.msra.mxu0 0
    %865 = vmatprep.subr.bf16.mxu0 0
    %866 = vmatpush1.bf16.msra.mxu0 0
    %867 = vmatprep.subr.bf16.mxu0 0
    %868 = vmatpush1.bf16.msra.mxu0 0
    %869 = vmatprep.subr.bf16.mxu0 0
    %870 = vmatpush1.bf16.msra.mxu0 0
    %871 = vmatprep.subr.bf16.mxu0 0
    %872 = vmatpush1.bf16.msra.mxu0 0
    %873 = vmatprep.mubr.bf16.mxu0 0
    %874 = vmatmul.mubr.bf16.gmra.mrb[0].mxu0 %v839
    %v875 = vpop.f32.mrb[0].mxu0
    %v876 = vadd.f32 %v812, %v875
    %v877 = vpop.f32.mrb[0].mxu0
    %v878 = vpop.f32.mrb[0].mxu0
    %v879 = vadd.f32 %v812, %v878
    %v880 = vpop.f32.mrb[0].mxu0
    %881 = vdwg.mxu0
    %v882 = vmax.f32 %v876, 0.0
    %v883 = vmax.f32 %v879, 0.0
    %v884 = vpack.c.bf16 %v883, %v882
    %v885 = vld [vmem:[%s5] sm:$0xf]
    %v886 = vld [vmem:[%s5 + $0x4] sm:$0xf]
    %v887 = vld [vmem:[%s5 + $0x8] sm:$0xf]
    %v888 = vld [vmem:[%s5 + $0xc] sm:$0xf]
    %v889 = vld [vmem:[%s5 + $0x10] sm:$0xf]
    %v890 = vld [vmem:[%s5 + $0x14] sm:$0xf]
    %v891 = vld [vmem:[%s5 + $0x18] sm:$0xf]
    %v892 = vld [vmem:[%s5 + $0x1c] sm:$0xf]
    %v893 = vld [vmem:[%s5 + $0x20] sm:$0xf]
    %v894 = vld [vmem:[%s5 + $0x24] sm:$0xf]
    %v895 = vld [vmem:[%s5 + $0x28] sm:$0xf]
    %v896 = vld [vmem:[%s5 + $0x2c] sm:$0xf]
    %v897 = vld [vmem:[%s5 + $0x30] sm:$0xf]
    %v898 = vld [vmem:[%s5 + $0x34] sm:$0xf]
    %v899 = vld [vmem:[%s5 + $0x38] sm:$0xf]
    %v900 = vld [vmem:[%s5 + $0x3c] sm:$0xf]
    %s901 = scalar_lea.vmem [#allocation8], 5
    %v902 = vld [vmem:[%s901] sm:$0x1]
    %v904 = vlaneseq
    %v905 = vshrl.u32 %v904, 7
    %v906 = vsub.s32 0, %v905
    %v907 = vrot.slane %v902, %v906
    %v925 = vunpack.c.l.b16 %v885
    %v926 = vunpack.c.l.b16 %v886
    %v927 = vunpack.c.l.b16 %v887
    %v928 = vunpack.c.l.b16 %v888
    %v929 = vunpack.c.l.b16 %v889
    %v930 = vunpack.c.l.b16 %v890
    %v931 = vunpack.c.l.b16 %v891
    %v932 = vunpack.c.l.b16 %v892
    %v933 = vunpack.c.l.b16 %v893
    %v934 = vunpack.c.l.b16 %v894
    %v935 = vunpack.c.l.b16 %v895
    %v936 = vunpack.c.l.b16 %v896
    %v937 = vunpack.c.l.b16 %v897
    %v938 = vunpack.c.l.b16 %v898
    %v939 = vunpack.c.l.b16 %v899
    %v940 = vunpack.c.l.b16 %v900
    %v941 = vpack.c.b16 %v926, %v925
    %v942 = vpack.c.b16 %v928, %v927
    %v943 = vpack.c.b16 %v930, %v929
    %v944 = vpack.c.b16 %v932, %v931
    %v945 = vpack.c.b16 %v934, %v933
    %v946 = vpack.c.b16 %v936, %v935
    %v947 = vpack.c.b16 %v938, %v937
    %v948 = vpack.c.b16 %v940, %v939
    %957 = vmatprep.subr.bf16.mxu0 0
    %958 = vmatpush1.bf16.msra.mxu0 %v941
    %959 = vmatprep.subr.bf16.mxu0 0
    %960 = vmatpush1.bf16.msra.mxu0 %v942
    %961 = vmatprep.subr.bf16.mxu0 0
    %962 = vmatpush1.bf16.msra.mxu0 %v943
    %963 = vmatprep.subr.bf16.mxu0 0
    %964 = vmatpush1.bf16.msra.mxu0 %v944
    %965 = vmatprep.subr.bf16.mxu0 0
    %966 = vmatpush1.bf16.msra.mxu0 %v945
    %967 = vmatprep.subr.bf16.mxu0 0
    %968 = vmatpush1.bf16.msra.mxu0 %v946
    %969 = vmatprep.subr.bf16.mxu0 0
    %970 = vmatpush1.bf16.msra.mxu0 %v947
    %971 = vmatprep.subr.bf16.mxu0 0
    %972 = vmatpush1.bf16.msra.mxu0 %v948
    %973 = vmatprep.subr.bf16.mxu0 0
    %974 = vmatpush1.bf16.msra.mxu0 0
    %975 = vmatprep.subr.bf16.mxu0 0
    %976 = vmatpush1.bf16.msra.mxu0 0
    %977 = vmatprep.subr.bf16.mxu0 0
    %978 = vmatpush1.bf16.msra.mxu0 0
    %979 = vmatprep.subr.bf16.mxu0 0
    %980 = vmatpush1.bf16.msra.mxu0 0
    %981 = vmatprep.subr.bf16.mxu0 0
    %982 = vmatpush1.bf16.msra.mxu0 0
    %983 = vmatprep.subr.bf16.mxu0 0
    %984 = vmatpush1.bf16.msra.mxu0 0
    %985 = vmatprep.subr.bf16.mxu0 0
    %986 = vmatpush1.bf16.msra.mxu0 0
    %987 = vmatprep.subr.bf16.mxu0 0
    %988 = vmatpush1.bf16.msra.mxu0 0
    %989 = vmatprep.mubr.bf16.mxu0 0
    %990 = vmatmul.mubr.bf16.gmra.mrb[0].mxu0 %v884
    %v991 = vpop.f32.mrb[0].mxu0
    %v992 = vadd.f32 %v907, %v991
    %v993 = vpop.f32.mrb[0].mxu0
    %v994 = vpop.f32.mrb[0].mxu0
    %v995 = vadd.f32 %v907, %v994
    %v996 = vpop.f32.mrb[0].mxu0
    %997 = vdwg.mxu0
    %v998 = vadd.f32 %v796, %v992
    %v999 = vadd.f32 %v797, %v995
    %s1000 = scalar_lea.vmem [#allocation8], 8
    %v1001 = vld [vmem:[%s1000] sm:$0x1]
    %s1002 = scalar_lea.vmem [#allocation8], 9
    %v1003 = vld [vmem:[%s1002] sm:$0x1]
    %v1004 = vsel %vm271, %v998, 0.0
    %1005 = vadd.xlane.f32.xlu0 %v1004
    %v1006 = vpop.xlane.xlu0 %1005
    %v1007 = vsel %vm271, %v999, 0.0
    %1008 = vadd.xlane.f32.xlu0 %v1007
    %v1009 = vpop.xlane.xlu0 %1008
    %v1010 = vmul.f32 %v1006, %v761
    %v1011 = vmul.f32 %v1009, %v761
    %v1012 = vsub.f32 %v998, %v1010
    %v1013 = vsub.f32 %v999, %v1011
    %v1014 = vmul.f32 %v1012, %v1012
    %v1015 = vmul.f32 %v1013, %v1013
    %v1016 = vsel %vm271, %v1014, 0.0
    %1017 = vadd.xlane.f32.xlu0 %v1016
    %v1018 = vpop.xlane.xlu0 %1017
    %v1019 = vsel %vm271, %v1015, 0.0
    %1020 = vadd.xlane.f32.xlu0 %v1019
    %v1021 = vpop.xlane.xlu0 %1020
    %v1022 = vmul.f32 %v1018, %v761
    %v1023 = vmul.f32 %v1021, %v761
    %v1024 = vadd.f32 %v1022, 1e-05
    %v1025 = vadd.f32 %v1023, 1e-05
    %v1026 = vrsqrt.pop %v1024
    %v1027 = vrsqrt.pop %v1025
    %v1028 = vmul.f32 %v1012, %v1026
    %v1029 = vmul.f32 %v1013, %v1027
    %v1031 = vlaneseq
    %v1032 = vshrl.u32 %v1031, 7
    %v1033 = vsub.s32 0, %v1032
    %v1034 = vrot.slane %v1001, %v1033
    %v1036 = vmul.f32 %v1028, %v1034
    %v1037 = vmul.f32 %v1029, %v1034
    %v1039 = vlaneseq
    %v1040 = vshrl.u32 %v1039, 7
    %v1041 = vsub.s32 0, %v1040
    %v1042 = vrot.slane %v1003, %v1041
    %v1044 = vadd.f32 %v1036, %v1042
    %v1045 = vadd.f32 %v1037, %v1042
    %v1046 = vpack.c.bf16 %v1045, %v1044
    %s1047 = scalar_lea.vmem %s3, 128
    %v1048 = vld [vmem:[%s1047] sm:$0xf]
    %v1049 = vld [vmem:[%s1047 + $0x4] sm:$0xf]
    %v1050 = vld [vmem:[%s1047 + $0x8] sm:$0xf]
    %v1051 = vld [vmem:[%s1047 + $0xc] sm:$0xf]
    %v1052 = vld [vmem:[%s1047 + $0x10] sm:$0xf]
    %v1053 = vld [vmem:[%s1047 + $0x14] sm:$0xf]
    %v1054 = vld [vmem:[%s1047 + $0x18] sm:$0xf]
    %v1055 = vld [vmem:[%s1047 + $0x1c] sm:$0xf]
    %s1056 = scalar_lea.vmem [#allocation8], 10
    %v1057 = vld [vmem:[%s1056] sm:$0x1]
    %v1059 = vlaneseq
    %v1060 = vshrl.u32 %v1059, 7
    %v1061 = vsub.s32 0, %v1060
    %v1062 = vrot.slane %v1057, %v1061
    %v1072 = vunpack.c.l.b16 %v1048
    %v1073 = vunpack.c.l.b16 %v1049
    %v1074 = vunpack.c.l.b16 %v1050
    %v1075 = vunpack.c.l.b16 %v1051
    %v1076 = vunpack.c.l.b16 %v1052
    %v1077 = vunpack.c.l.b16 %v1053
    %v1078 = vunpack.c.l.b16 %v1054
    %v1079 = vunpack.c.l.b16 %v1055
    %v1080 = vpack.c.b16 %v1073, %v1072
    %v1081 = vpack.c.b16 %v1075, %v1074
    %v1082 = vpack.c.b16 %v1077, %v1076
    %v1083 = vpack.c.b16 %v1079, %v1078
    %v1089 = vsel %vm271, %v1046, 0
    %1091 = vmatprep.subr.bf16.mxu0 0
    %1092 = vmatpush1.bf16.msra.mxu0 %v1080
    %1093 = vmatprep.subr.bf16.mxu0 0
    %1094 = vmatpush1.bf16.msra.mxu0 %v1081
    %1095 = vmatprep.subr.bf16.mxu0 0
    %1096 = vmatpush1.bf16.msra.mxu0 %v1082
    %1097 = vmatprep.subr.bf16.mxu0 0
    %1098 = vmatpush1.bf16.msra.mxu0 %v1083
    %1099 = vmatprep.subr.bf16.mxu0 0
    %1100 = vmatpush1.bf16.msra.mxu0 0
    %1101 = vmatprep.subr.bf16.mxu0 0
    %1102 = vmatpush1.bf16.msra.mxu0 0
    %1103 = vmatprep.subr.bf16.mxu0 0
    %1104 = vmatpush1.bf16.msra.mxu0 0
    %1105 = vmatprep.subr.bf16.mxu0 0
    %1106 = vmatpush1.bf16.msra.mxu0 0
    %1107 = vmatprep.subr.bf16.mxu0 0
    %1108 = vmatpush1.bf16.msra.mxu0 0
    %1109 = vmatprep.subr.bf16.mxu0 0
    %1110 = vmatpush1.bf16.msra.mxu0 0
    %1111 = vmatprep.subr.bf16.mxu0 0
    %1112 = vmatpush1.bf16.msra.mxu0 0
    %1113 = vmatprep.subr.bf16.mxu0 0
    %1114 = vmatpush1.bf16.msra.mxu0 0
    %1115 = vmatprep.subr.bf16.mxu0 0
    %1116 = vmatpush1.bf16.msra.mxu0 0
    %1117 = vmatprep.subr.bf16.mxu0 0
    %1118 = vmatpush1.bf16.msra.mxu0 0
    %1119 = vmatprep.subr.bf16.mxu0 0
    %1120 = vmatpush1.bf16.msra.mxu0 0
    %1121 = vmatprep.subr.bf16.mxu0 0
    %1122 = vmatpush1.bf16.msra.mxu0 0
    %1123 = vmatprep.mubr.bf16.mxu0 0
    %1124 = vmatmul.mubr.bf16.gmra.mrb[0].mxu0 %v1089
    %v1125 = vpop.f32.mrb[0].mxu0
    %v1126 = vadd.f32 %v1062, %v1125
    %v1127 = vpop.f32.mrb[0].mxu0
    %v1128 = vpop.f32.mrb[0].mxu0
    %v1129 = vadd.f32 %v1062, %v1128
    %v1130 = vpop.f32.mrb[0].mxu0
    %1131 = vdwg.mxu0
    %s1132 = scalar_lea.vmem %s3, 160
    %v1133 = vld [vmem:[%s1132] sm:$0xf]
    %v1134 = vld [vmem:[%s1132 + $0x4] sm:$0xf]
    %v1135 = vld [vmem:[%s1132 + $0x8] sm:$0xf]
    %v1136 = vld [vmem:[%s1132 + $0xc] sm:$0xf]
    %v1137 = vld [vmem:[%s1132 + $0x10] sm:$0xf]
    %v1138 = vld [vmem:[%s1132 + $0x14] sm:$0xf]
    %v1139 = vld [vmem:[%s1132 + $0x18] sm:$0xf]
    %v1140 = vld [vmem:[%s1132 + $0x1c] sm:$0xf]
    %s1141 = scalar_lea.vmem [#allocation8], 11
    %v1142 = vld [vmem:[%s1141] sm:$0x1]
    %v1144 = vlaneseq
    %v1145 = vshrl.u32 %v1144, 7
    %v1146 = vsub.s32 0, %v1145
    %v1147 = vrot.slane %v1142, %v1146
    %v1157 = vunpack.c.l.b16 %v1133
    %v1158 = vunpack.c.l.b16 %v1134
    %v1159 = vunpack.c.l.b16 %v1135
    %v1160 = vunpack.c.l.b16 %v1136
    %v1161 = vunpack.c.l.b16 %v1137
    %v1162 = vunpack.c.l.b16 %v1138
    %v1163 = vunpack.c.l.b16 %v1139
    %v1164 = vunpack.c.l.b16 %v1140
    %v1165 = vpack.c.b16 %v1158, %v1157
    %v1166 = vpack.c.b16 %v1160, %v1159
    %v1167 = vpack.c.b16 %v1162, %v1161
    %v1168 = vpack.c.b16 %v1164, %v1163
    %1173 = vmatprep.subr.bf16.mxu0 0
    %1174 = vmatpush1.bf16.msra.mxu0 %v1165
    %1175 = vmatprep.subr.bf16.mxu0 0
    %1176 = vmatpush1.bf16.msra.mxu0 %v1166
    %1177 = vmatprep.subr.bf16.mxu0 0
    %1178 = vmatpush1.bf16.msra.mxu0 %v1167
    %1179 = vmatprep.subr.bf16.mxu0 0
    %1180 = vmatpush1.bf16.msra.mxu0 %v1168
    %1181 = vmatprep.subr.bf16.mxu0 0
    %1182 = vmatpush1.bf16.msra.mxu0 0
    %1183 = vmatprep.subr.bf16.mxu0 0
    %1184 = vmatpush1.bf16.msra.mxu0 0
    %1185 = vmatprep.subr.bf16.mxu0 0
    %1186 = vmatpush1.bf16.msra.mxu0 0
    %1187 = vmatprep.subr.bf16.mxu0 0
    %1188 = vmatpush1.bf16.msra.mxu0 0
    %1189 = vmatprep.subr.bf16.mxu0 0
    %1190 = vmatpush1.bf16.msra.mxu0 0
    %1191 = vmatprep.subr.bf16.mxu0 0
    %1192 = vmatpush1.bf16.msra.mxu0 0
    %1193 = vmatprep.subr.bf16.mxu0 0
    %1194 = vmatpush1.bf16.msra.mxu0 0
    %1195 = vmatprep.subr.bf16.mxu0 0
    %1196 = vmatpush1.bf16.msra.mxu0 0
    %1197 = vmatprep.subr.bf16.mxu0 0
    %1198 = vmatpush1.bf16.msra.mxu0 0
    %1199 = vmatprep.subr.bf16.mxu0 0
    %1200 = vmatpush1.bf16.msra.mxu0 0
    %1201 = vmatprep.subr.bf16.mxu0 0
    %1202 = vmatpush1.bf16.msra.mxu0 0
    %1203 = vmatprep.subr.bf16.mxu0 0
    %1204 = vmatpush1.bf16.msra.mxu0 0
    %1205 = vmatprep.mubr.bf16.mxu0 0
    %1206 = vmatmul.mubr.bf16.gmra.mrb[0].mxu0 %v1089
    %v1207 = vpop.f32.mrb[0].mxu0
    %v1208 = vadd.f32 %v1147, %v1207
    %v1209 = vpop.f32.mrb[0].mxu0
    %v1210 = vpop.f32.mrb[0].mxu0
    %v1211 = vadd.f32 %v1147, %v1210
    %v1212 = vpop.f32.mrb[0].mxu0
    %1213 = vdwg.mxu0
    %s1214 = scalar_lea.vmem %s3, 192
    %v1215 = vld [vmem:[%s1214] sm:$0xf]
    %v1216 = vld [vmem:[%s1214 + $0x4] sm:$0xf]
    %v1217 = vld [vmem:[%s1214 + $0x8] sm:$0xf]
    %v1218 = vld [vmem:[%s1214 + $0xc] sm:$0xf]
    %v1219 = vld [vmem:[%s1214 + $0x10] sm:$0xf]
    %v1220 = vld [vmem:[%s1214 + $0x14] sm:$0xf]
    %v1221 = vld [vmem:[%s1214 + $0x18] sm:$0xf]
    %v1222 = vld [vmem:[%s1214 + $0x1c] sm:$0xf]
    %s1223 = scalar_lea.vmem [#allocation8], 12
    %v1224 = vld [vmem:[%s1223] sm:$0x1]
    %v1226 = vlaneseq
    %v1227 = vshrl.u32 %v1226, 7
    %v1228 = vsub.s32 0, %v1227
    %v1229 = vrot.slane %v1224, %v1228
    %v1239 = vunpack.c.l.b16 %v1215
    %v1240 = vunpack.c.l.b16 %v1216
    %v1241 = vunpack.c.l.b16 %v1217
    %v1242 = vunpack.c.l.b16 %v1218
    %v1243 = vunpack.c.l.b16 %v1219
    %v1244 = vunpack.c.l.b16 %v1220
    %v1245 = vunpack.c.l.b16 %v1221
    %v1246 = vunpack.c.l.b16 %v1222
    %v1247 = vpack.c.b16 %v1240, %v1239
    %v1248 = vpack.c.b16 %v1242, %v1241
    %v1249 = vpack.c.b16 %v1244, %v1243
    %v1250 = vpack.c.b16 %v1246, %v1245
    %1255 = vmatprep.subr.bf16.mxu0 0
    %1256 = vmatpush1.bf16.msra.mxu0 %v1247
    %1257 = vmatprep.subr.bf16.mxu0 0
    %1258 = vmatpush1.bf16.msra.mxu0 %v1248
    %1259 = vmatprep.subr.bf16.mxu0 0
    %1260 = vmatpush1.bf16.msra.mxu0 %v1249
    %1261 = vmatprep.subr.bf16.mxu0 0
    %1262 = vmatpush1.bf16.msra.mxu0 %v1250
    %1263 = vmatprep.subr.bf16.mxu0 0
    %1264 = vmatpush1.bf16.msra.mxu0 0
    %1265 = vmatprep.subr.bf16.mxu0 0
    %1266 = vmatpush1.bf16.msra.mxu0 0
    %1267 = vmatprep.subr.bf16.mxu0 0
    %1268 = vmatpush1.bf16.msra.mxu0 0
    %1269 = vmatprep.subr.bf16.mxu0 0
    %1270 = vmatpush1.bf16.msra.mxu0 0
    %1271 = vmatprep.subr.bf16.mxu0 0
    %1272 = vmatpush1.bf16.msra.mxu0 0
    %1273 = vmatprep.subr.bf16.mxu0 0
    %1274 = vmatpush1.bf16.msra.mxu0 0
    %1275 = vmatprep.subr.bf16.mxu0 0
    %1276 = vmatpush1.bf16.msra.mxu0 0
    %1277 = vmatprep.subr.bf16.mxu0 0
    %1278 = vmatpush1.bf16.msra.mxu0 0
    %1279 = vmatprep.subr.bf16.mxu0 0
    %1280 = vmatpush1.bf16.msra.mxu0 0
    %1281 = vmatprep.subr.bf16.mxu0 0
    %1282 = vmatpush1.bf16.msra.mxu0 0
    %1283 = vmatprep.subr.bf16.mxu0 0
    %1284 = vmatpush1.bf16.msra.mxu0 0
    %1285 = vmatprep.subr.bf16.mxu0 0
    %1286 = vmatpush1.bf16.msra.mxu0 0
    %1287 = vmatprep.mubr.bf16.mxu0 0
    %1288 = vmatmul.mubr.bf16.gmra.mrb[0].mxu0 %v1089
    %v1289 = vpop.f32.mrb[0].mxu0
    %v1290 = vadd.f32 %v1229, %v1289
    %v1291 = vpop.f32.mrb[0].mxu0
    %v1292 = vpop.f32.mrb[0].mxu0
    %v1293 = vadd.f32 %v1229, %v1292
    %v1294 = vpop.f32.mrb[0].mxu0
    %1295 = vdwg.mxu0
    %v1296 = vmul.f32 %v1208, %v154
    %v1297 = vmul.f32 %v1211, %v155
    %v1298 = vmul.f32 %v1208, %v156
    %v1299 = vmul.f32 %v1211, %v157
    %v1300 = vmul.f32 %v1208, %v158
    %v1301 = vmul.f32 %v1211, %v159
    %v1302 = vmul.f32 %v1208, %v160
    %v1303 = vmul.f32 %v1211, %v161
    %v1304 = vpack.c.bf16 %v1297, %v1296
    %v1305 = vpack.c.bf16 %v1299, %v1298
    %v1306 = vpack.c.bf16 %v1301, %v1300
    %v1307 = vpack.c.bf16 %v1303, %v1302
    %v1308 = vmul.f32 %v1290, %v154
    %v1309 = vmul.f32 %v1293, %v155
    %v1310 = vmul.f32 %v1290, %v156
    %v1311 = vmul.f32 %v1293, %v157
    %v1312 = vmul.f32 %v1290, %v158
    %v1313 = vmul.f32 %v1293, %v159
    %v1314 = vmul.f32 %v1290, %v160
    %v1315 = vmul.f32 %v1293, %v161
    %v1316 = vpack.c.bf16 %v1309, %v1308
    %v1317 = vpack.c.bf16 %v1311, %v1310
    %v1318 = vpack.c.bf16 %v1313, %v1312
    %v1319 = vpack.c.bf16 %v1315, %v1314
    %v1320 = vpack.c.bf16 %v1129, %v1126
    %v1322 = vsel %vm271, %v1320, 0
    %v1325 = vsel %vm271, %v1304, 0
    %v1328 = vsel %vm271, %v1305, 0
    %v1331 = vsel %vm271, %v1306, 0
    %v1334 = vsel %vm271, %v1307, 0
    %1336 = vmatprep.subr.bf16.mxu0 0
    %1337 = vmatpush1.bf16.xpose.msra.mxu0 %v1325
    %1338 = vmatprep.subr.bf16.mxu0 0
    %1339 = vmatpush1.bf16.xpose.msra.mxu0 %v1328
    %1340 = vmatprep.subr.bf16.mxu0 0
    %1341 = vmatpush1.bf16.xpose.msra.mxu0 %v1331
    %1342 = vmatprep.subr.bf16.mxu0 0
    %1343 = vmatpush1.bf16.xpose.msra.mxu0 %v1334
    %1344 = vmatprep.subr.bf16.mxu0 0
    %1345 = vmatpush1.bf16.xpose.msra.mxu0 0
    %1346 = vmatprep.subr.bf16.mxu0 0
    %1347 = vmatpush1.bf16.xpose.msra.mxu0 0
    %1348 = vmatprep.subr.bf16.mxu0 0
    %1349 = vmatpush1.bf16.xpose.msra.mxu0 0
    %1350 = vmatprep.subr.bf16.mxu0 0
    %1351 = vmatpush1.bf16.xpose.msra.mxu0 0
    %1352 = vmatprep.subr.bf16.mxu0 0
    %1353 = vmatpush1.bf16.xpose.msra.mxu0 0
    %1354 = vmatprep.subr.bf16.mxu0 0
    %1355 = vmatpush1.bf16.xpose.msra.mxu0 0
    %1356 = vmatprep.subr.bf16.mxu0 0
    %1357 = vmatpush1.bf16.xpose.msra.mxu0 0
    %1358 = vmatprep.subr.bf16.mxu0 0
    %1359 = vmatpush1.bf16.xpose.msra.mxu0 0
    %1360 = vmatprep.subr.bf16.mxu0 0
    %1361 = vmatpush1.bf16.xpose.msra.mxu0 0
    %1362 = vmatprep.subr.bf16.mxu0 0
    %1363 = vmatpush1.bf16.xpose.msra.mxu0 0
    %1364 = vmatprep.subr.bf16.mxu0 0
    %1365 = vmatpush1.bf16.xpose.msra.mxu0 0
    %1366 = vmatprep.subr.bf16.mxu0 0
    %1367 = vmatpush1.bf16.xpose.msra.mxu0 0
    %1368 = vmatprep.mubr.bf16.mxu0 0
    %1369 = vmatmul.mubr.bf16.gmra.mrb[0].mxu0 %v1322
    %v1370 = vpop.f32.mrb[0].mxu0
    %v1371 = vadd.f32 %v152, %v1370
    %v1372 = vpop.f32.mrb[0].mxu0
    %v1373 = vpop.f32.mrb[0].mxu0
    %v1374 = vadd.f32 %v153, %v1373
    %v1375 = vpop.f32.mrb[0].mxu0
    %1376 = vdwg.mxu0
    %v1377 = vsel %vm271, %v1371, -inf
    %1378 = vmax.xlane.f32.xlu0 %v1377
    %v1379 = vpop.xlane.xlu0 %1378
    %v1380 = vsel %vm271, %v1374, -inf
    %1381 = vmax.xlane.f32.xlu0 %v1380
    %v1382 = vpop.xlane.xlu0 %1381
    %v1383 = vsub.f32 %v1371, %v1379
    %v1384 = vsub.f32 %v1374, %v1382
    %v1385 = vmul.f32 %v1383, 1.442695
    %v1386 = vpow.pop %v1385
    %v1387 = vmul.f32 %v1384, 1.442695
    %v1388 = vpow.pop %v1387
    %v1389 = vpack.c.bf16 %v1388, %v1386
    %v1391 = vsel %vm271, %v1389, 0
    %1393 = vmatprep.subr.bf16.mxu0 0
    %1394 = vmatpush1.bf16.msra.mxu0 %v1316
    %1395 = vmatprep.subr.bf16.mxu0 0
    %1396 = vmatpush1.bf16.msra.mxu0 %v1317
    %1397 = vmatprep.subr.bf16.mxu0 0
    %1398 = vmatpush1.bf16.msra.mxu0 %v1318
    %1399 = vmatprep.subr.bf16.mxu0 0
    %1400 = vmatpush1.bf16.msra.mxu0 %v1319
    %1401 = vmatprep.subr.bf16.mxu0 0
    %1402 = vmatpush1.bf16.msra.mxu0 0
    %1403 = vmatprep.subr.bf16.mxu0 0
    %1404 = vmatpush1.bf16.msra.mxu0 0
    %1405 = vmatprep.subr.bf16.mxu0 0
    %1406 = vmatpush1.bf16.msra.mxu0 0
    %1407 = vmatprep.subr.bf16.mxu0 0
    %1408 = vmatpush1.bf16.msra.mxu0 0
    %1409 = vmatprep.subr.bf16.mxu0 0
    %1410 = vmatpush1.bf16.msra.mxu0 0
    %1411 = vmatprep.subr.bf16.mxu0 0
    %1412 = vmatpush1.bf16.msra.mxu0 0
    %1413 = vmatprep.subr.bf16.mxu0 0
    %1414 = vmatpush1.bf16.msra.mxu0 0
    %1415 = vmatprep.subr.bf16.mxu0 0
    %1416 = vmatpush1.bf16.msra.mxu0 0
    %1417 = vmatprep.subr.bf16.mxu0 0
    %1418 = vmatpush1.bf16.msra.mxu0 0
    %1419 = vmatprep.subr.bf16.mxu0 0
    %1420 = vmatpush1.bf16.msra.mxu0 0
    %1421 = vmatprep.subr.bf16.mxu0 0
    %1422 = vmatpush1.bf16.msra.mxu0 0
    %1423 = vmatprep.subr.bf16.mxu0 0
    %1424 = vmatpush1.bf16.msra.mxu0 0
    %1425 = vmatprep.mubr.bf16.mxu0 0
    %1426 = vmatmul.mubr.bf16.gmra.mrb[0].mxu0 %v1391
    %v1427 = vpop.f32.mrb[0].mxu0
    %v1428 = vadd.f32 0.0, %v1427
    %v1429 = vpop.f32.mrb[0].mxu0
    %v1430 = vpop.f32.mrb[0].mxu0
    %v1431 = vadd.f32 0.0, %v1430
    %v1432 = vpop.f32.mrb[0].mxu0
    %1433 = vdwg.mxu0
    %1434 = vmatprep.subr.bf16.mxu0 0
    %1435 = vmatpush1.bf16.msra.mxu0 %v162
    %1436 = vmatprep.subr.bf16.mxu0 0
    %1437 = vmatpush1.bf16.msra.mxu0 %v163
    %1438 = vmatprep.subr.bf16.mxu0 0
    %1439 = vmatpush1.bf16.msra.mxu0 %v164
    %1440 = vmatprep.subr.bf16.mxu0 0
    %1441 = vmatpush1.bf16.msra.mxu0 %v165
    %1442 = vmatprep.subr.bf16.mxu0 0
    %1443 = vmatpush1.bf16.msra.mxu0 0
    %1444 = vmatprep.subr.bf16.mxu0 0
    %1445 = vmatpush1.bf16.msra.mxu0 0
    %1446 = vmatprep.subr.bf16.mxu0 0
    %1447 = vmatpush1.bf16.msra.mxu0 0
    %1448 = vmatprep.subr.bf16.mxu0 0
    %1449 = vmatpush1.bf16.msra.mxu0 0
    %1450 = vmatprep.subr.bf16.mxu0 0
    %1451 = vmatpush1.bf16.msra.mxu0 0
    %1452 = vmatprep.subr.bf16.mxu0 0
    %1453 = vmatpush1.bf16.msra.mxu0 0
    %1454 = vmatprep.subr.bf16.mxu0 0
    %1455 = vmatpush1.bf16.msra.mxu0 0
    %1456 = vmatprep.subr.bf16.mxu0 0
    %1457 = vmatpush1.bf16.msra.mxu0 0
    %1458 = vmatprep.subr.bf16.mxu0 0
    %1459 = vmatpush1.bf16.msra.mxu0 0
    %1460 = vmatprep.subr.bf16.mxu0 0
    %1461 = vmatpush1.bf16.msra.mxu0 0
    %1462 = vmatprep.subr.bf16.mxu0 0
    %1463 = vmatpush1.bf16.msra.mxu0 0
    %1464 = vmatprep.subr.bf16.mxu0 0
    %1465 = vmatpush1.bf16.msra.mxu0 0
    %1466 = vmatprep.mubr.bf16.mxu0 0
    %1467 = vmatmul.mubr.bf16.gmra.mrb[0].mxu0 %v1391
    %v1468 = vpop.f32.mrb[0].mxu0
    %v1469 = vadd.f32 0.0, %v1468
    %v1470 = vpop.f32.mrb[0].mxu0
    %v1471 = vpop.f32.mrb[0].mxu0
    %v1472 = vadd.f32 0.0, %v1471
    %v1473 = vpop.f32.mrb[0].mxu0
    %1474 = vdwg.mxu0
    %v1475 = vrcp.pop %v1469
    %v1476 = vrcp.pop %v1472
    %v1477 = vmul.f32 %v1428, %v1475
    %v1478 = vmul.f32 %v1431, %v1476
    %v1479 = vpack.c.bf16 %v1478, %v1477
    %s1480 = scalar_lea.vmem %s3, 224
    %v1481 = vld [vmem:[%s1480] sm:$0xf]
    %v1482 = vld [vmem:[%s1480 + $0x4] sm:$0xf]
    %v1483 = vld [vmem:[%s1480 + $0x8] sm:$0xf]
    %v1484 = vld [vmem:[%s1480 + $0xc] sm:$0xf]
    %v1485 = vld [vmem:[%s1480 + $0x10] sm:$0xf]
    %v1486 = vld [vmem:[%s1480 + $0x14] sm:$0xf]
    %v1487 = vld [vmem:[%s1480 + $0x18] sm:$0xf]
    %v1488 = vld [vmem:[%s1480 + $0x1c] sm:$0xf]
    %s1489 = scalar_lea.vmem [#allocation8], 13
    %v1490 = vld [vmem:[%s1489] sm:$0x1]
    %v1492 = vlaneseq
    %v1493 = vshrl.u32 %v1492, 7
    %v1494 = vsub.s32 0, %v1493
    %v1495 = vrot.slane %v1490, %v1494
    %v1505 = vunpack.c.l.b16 %v1481
    %v1506 = vunpack.c.l.b16 %v1482
    %v1507 = vunpack.c.l.b16 %v1483
    %v1508 = vunpack.c.l.b16 %v1484
    %v1509 = vunpack.c.l.b16 %v1485
    %v1510 = vunpack.c.l.b16 %v1486
    %v1511 = vunpack.c.l.b16 %v1487
    %v1512 = vunpack.c.l.b16 %v1488
    %v1513 = vpack.c.b16 %v1506, %v1505
    %v1514 = vpack.c.b16 %v1508, %v1507
    %v1515 = vpack.c.b16 %v1510, %v1509
    %v1516 = vpack.c.b16 %v1512, %v1511
    %v1522 = vsel %vm271, %v1479, 0
    %1524 = vmatprep.subr.bf16.mxu0 0
    %1525 = vmatpush1.bf16.msra.mxu0 %v1513
    %1526 = vmatprep.subr.bf16.mxu0 0
    %1527 = vmatpush1.bf16.msra.mxu0 %v1514
    %1528 = vmatprep.subr.bf16.mxu0 0
    %1529 = vmatpush1.bf16.msra.mxu0 %v1515
    %1530 = vmatprep.subr.bf16.mxu0 0
    %1531 = vmatpush1.bf16.msra.mxu0 %v1516
    %1532 = vmatprep.subr.bf16.mxu0 0
    %1533 = vmatpush1.bf16.msra.mxu0 0
    %1534 = vmatprep.subr.bf16.mxu0 0
    %1535 = vmatpush1.bf16.msra.mxu0 0
    %1536 = vmatprep.subr.bf16.mxu0 0
    %1537 = vmatpush1.bf16.msra.mxu0 0
    %1538 = vmatprep.subr.bf16.mxu0 0
    %1539 = vmatpush1.bf16.msra.mxu0 0
    %1540 = vmatprep.subr.bf16.mxu0 0
    %1541 = vmatpush1.bf16.msra.mxu0 0
    %1542 = vmatprep.subr.bf16.mxu0 0
    %1543 = vmatpush1.bf16.msra.mxu0 0
    %1544 = vmatprep.subr.bf16.mxu0 0
    %1545 = vmatpush1.bf16.msra.mxu0 0
    %1546 = vmatprep.subr.bf16.mxu0 0
    %1547 = vmatpush1.bf16.msra.mxu0 0
    %1548 = vmatprep.subr.bf16.mxu0 0
    %1549 = vmatpush1.bf16.msra.mxu0 0
    %1550 = vmatprep.subr.bf16.mxu0 0
    %1551 = vmatpush1.bf16.msra.mxu0 0
    %1552 = vmatprep.subr.bf16.mxu0 0
    %1553 = vmatpush1.bf16.msra.mxu0 0
    %1554 = vmatprep.subr.bf16.mxu0 0
    %1555 = vmatpush1.bf16.msra.mxu0 0
    %1556 = vmatprep.mubr.bf16.mxu0 0
    %1557 = vmatmul.mubr.bf16.gmra.mrb[0].mxu0 %v1522
    %v1558 = vpop.f32.mrb[0].mxu0
    %v1559 = vadd.f32 %v1495, %v1558
    %v1560 = vpop.f32.mrb[0].mxu0
    %v1561 = vpop.f32.mrb[0].mxu0
    %v1562 = vadd.f32 %v1495, %v1561
    %v1563 = vpop.f32.mrb[0].mxu0
    %1564 = vdwg.mxu0
    %v1565 = vadd.f32 %v1044, %v1559
    %v1566 = vadd.f32 %v1045, %v1562
    %s1567 = scalar_lea.vmem [#allocation8], 15
    %v1568 = vld [vmem:[%s1567] sm:$0x1]
    %s1569 = scalar_lea.vmem [#allocation8], 16
    %v1570 = vld [vmem:[%s1569] sm:$0x1]
    %v1571 = vsel %vm271, %v1565, 0.0
    %1572 = vadd.xlane.f32.xlu0 %v1571
    %v1573 = vpop.xlane.xlu0 %1572
    %v1574 = vsel %vm271, %v1566, 0.0
    %1575 = vadd.xlane.f32.xlu0 %v1574
    %v1576 = vpop.xlane.xlu0 %1575
    %v1577 = vmul.f32 %v1573, %v761
    %v1578 = vmul.f32 %v1576, %v761
    %v1579 = vsub.f32 %v1565, %v1577
    %v1580 = vsub.f32 %v1566, %v1578
    %v1581 = vmul.f32 %v1579, %v1579
    %v1582 = vmul.f32 %v1580, %v1580
    %v1583 = vsel %vm271, %v1581, 0.0
    %1584 = vadd.xlane.f32.xlu0 %v1583
    %v1585 = vpop.xlane.xlu0 %1584
    %v1586 = vsel %vm271, %v1582, 0.0
    %1587 = vadd.xlane.f32.xlu0 %v1586
    %v1588 = vpop.xlane.xlu0 %1587
    %v1589 = vmul.f32 %v1585, %v761
    %v1590 = vmul.f32 %v1588, %v761
    %v1591 = vadd.f32 %v1589, 1e-05
    %v1592 = vadd.f32 %v1590, 1e-05
    %v1593 = vrsqrt.pop %v1591
    %v1594 = vrsqrt.pop %v1592
    %v1595 = vmul.f32 %v1579, %v1593
    %v1596 = vmul.f32 %v1580, %v1594
    %v1598 = vlaneseq
    %v1599 = vshrl.u32 %v1598, 7
    %v1600 = vsub.s32 0, %v1599
    %v1601 = vrot.slane %v1568, %v1600
    %v1603 = vmul.f32 %v1595, %v1601
    %v1604 = vmul.f32 %v1596, %v1601
    %v1606 = vlaneseq
    %v1607 = vshrl.u32 %v1606, 7
    %v1608 = vsub.s32 0, %v1607
    %v1609 = vrot.slane %v1570, %v1608
    %v1611 = vadd.f32 %v1603, %v1609
    %v1612 = vadd.f32 %v1604, %v1609
    %v1613 = vpack.c.bf16 %v1612, %v1611
    %s1614 = scalar_lea.vmem [#allocation7], 32
    %v1615 = vld [vmem:[%s1614] sm:$0xf]
    %v1616 = vld [vmem:[%s1614 + $0x4] sm:$0xf]
    %v1617 = vld [vmem:[%s1614 + $0x8] sm:$0xf]
    %v1618 = vld [vmem:[%s1614 + $0xc] sm:$0xf]
    %v1619 = vld [vmem:[%s1614 + $0x10] sm:$0xf]
    %v1620 = vld [vmem:[%s1614 + $0x14] sm:$0xf]
    %v1621 = vld [vmem:[%s1614 + $0x18] sm:$0xf]
    %v1622 = vld [vmem:[%s1614 + $0x1c] sm:$0xf]
    %s1623 = scalar_lea.vmem %s9, 1
    %v1624 = vld [vmem:[%s1623] sm:$0x1]
    %v1626 = vlaneseq
    %v1627 = vshrl.u32 %v1626, 7
    %v1628 = vsub.s32 0, %v1627
    %v1629 = vrot.slane %v1624, %v1628
    %v1639 = vunpack.c.l.b16 %v1615
    %v1640 = vunpack.c.l.b16 %v1616
    %v1641 = vunpack.c.l.b16 %v1617
    %v1642 = vunpack.c.l.b16 %v1618
    %v1643 = vunpack.c.l.b16 %v1619
    %v1644 = vunpack.c.l.b16 %v1620
    %v1645 = vunpack.c.l.b16 %v1621
    %v1646 = vunpack.c.l.b16 %v1622
    %v1647 = vpack.c.b16 %v1640, %v1639
    %v1648 = vpack.c.b16 %v1642, %v1641
    %v1649 = vpack.c.b16 %v1644, %v1643
    %v1650 = vpack.c.b16 %v1646, %v1645
    %v1656 = vsel %vm271, %v1613, 0
    %1658 = vmatprep.subr.bf16.mxu0 0
    %1659 = vmatpush1.bf16.msra.mxu0 %v1647
    %1660 = vmatprep.subr.bf16.mxu0 0
    %1661 = vmatpush1.bf16.msra.mxu0 %v1648
    %1662 = vmatprep.subr.bf16.mxu0 0
    %1663 = vmatpush1.bf16.msra.mxu0 %v1649
    %1664 = vmatprep.subr.bf16.mxu0 0
    %1665 = vmatpush1.bf16.msra.mxu0 %v1650
    %1666 = vmatprep.subr.bf16.mxu0 0
    %1667 = vmatpush1.bf16.msra.mxu0 0
    %1668 = vmatprep.subr.bf16.mxu0 0
    %1669 = vmatpush1.bf16.msra.mxu0 0
    %1670 = vmatprep.subr.bf16.mxu0 0
    %1671 = vmatpush1.bf16.msra.mxu0 0
    %1672 = vmatprep.subr.bf16.mxu0 0
    %1673 = vmatpush1.bf16.msra.mxu0 0
    %1674 = vmatprep.subr.bf16.mxu0 0
    %1675 = vmatpush1.bf16.msra.mxu0 0
    %1676 = vmatprep.subr.bf16.mxu0 0
    %1677 = vmatpush1.bf16.msra.mxu0 0
    %1678 = vmatprep.subr.bf16.mxu0 0
    %1679 = vmatpush1.bf16.msra.mxu0 0
    %1680 = vmatprep.subr.bf16.mxu0 0
    %1681 = vmatpush1.bf16.msra.mxu0 0
    %1682 = vmatprep.subr.bf16.mxu0 0
    %1683 = vmatpush1.bf16.msra.mxu0 0
    %1684 = vmatprep.subr.bf16.mxu0 0
    %1685 = vmatpush1.bf16.msra.mxu0 0
    %1686 = vmatprep.subr.bf16.mxu0 0
    %1687 = vmatpush1.bf16.msra.mxu0 0
    %1688 = vmatprep.subr.bf16.mxu0 0
    %1689 = vmatpush1.bf16.msra.mxu0 0
    %1690 = vmatprep.mubr.bf16.mxu0 0
    %1691 = vmatmul.mubr.bf16.gmra.mrb[0].mxu0 %v1656
    %v1692 = vpop.f32.mrb[0].mxu0
    %v1693 = vadd.f32 %v1629, %v1692
    %v1694 = vpop.f32.mrb[0].mxu0
    %v1695 = vpop.f32.mrb[0].mxu0
    %v1696 = vadd.f32 %v1629, %v1695
    %v1697 = vpop.f32.mrb[0].mxu0
    %1698 = vdwg.mxu0
    %v1699 = vmax.f32 %v1693, 0.0
    %v1700 = vmax.f32 %v1696, 0.0
    %v1701 = vpack.c.bf16 %v1700, %v1699
    %s1702 = scalar_lea.vmem %s5, 64
    %v1703 = vld [vmem:[%s1702] sm:$0xf]
    %v1704 = vld [vmem:[%s1702 + $0x4] sm:$0xf]
    %v1705 = vld [vmem:[%s1702 + $0x8] sm:$0xf]
    %v1706 = vld [vmem:[%s1702 + $0xc] sm:$0xf]
    %v1707 = vld [vmem:[%s1702 + $0x10] sm:$0xf]
    %v1708 = vld [vmem:[%s1702 + $0x14] sm:$0xf]
    %v1709 = vld [vmem:[%s1702 + $0x18] sm:$0xf]
    %v1710 = vld [vmem:[%s1702 + $0x1c] sm:$0xf]
    %v1711 = vld [vmem:[%s1702 + $0x20] sm:$0xf]
    %v1712 = vld [vmem:[%s1702 + $0x24] sm:$0xf]
    %v1713 = vld [vmem:[%s1702 + $0x28] sm:$0xf]
    %v1714 = vld [vmem:[%s1702 + $0x2c] sm:$0xf]
    %v1715 = vld [vmem:[%s1702 + $0x30] sm:$0xf]
    %v1716 = vld [vmem:[%s1702 + $0x34] sm:$0xf]
    %v1717 = vld [vmem:[%s1702 + $0x38] sm:$0xf]
    %v1718 = vld [vmem:[%s1702 + $0x3c] sm:$0xf]
    %s1719 = scalar_lea.vmem [#allocation8], 14
    %v1720 = vld [vmem:[%s1719] sm:$0x1]
    %v1722 = vlaneseq
    %v1723 = vshrl.u32 %v1722, 7
    %v1724 = vsub.s32 0, %v1723
    %v1725 = vrot.slane %v1720, %v1724
    %v1743 = vunpack.c.l.b16 %v1703
    %v1744 = vunpack.c.l.b16 %v1704
    %v1745 = vunpack.c.l.b16 %v1705
    %v1746 = vunpack.c.l.b16 %v1706
    %v1747 = vunpack.c.l.b16 %v1707
    %v1748 = vunpack.c.l.b16 %v1708
    %v1749 = vunpack.c.l.b16 %v1709
    %v1750 = vunpack.c.l.b16 %v1710
    %v1751 = vunpack.c.l.b16 %v1711
    %v1752 = vunpack.c.l.b16 %v1712
    %v1753 = vunpack.c.l.b16 %v1713
    %v1754 = vunpack.c.l.b16 %v1714
    %v1755 = vunpack.c.l.b16 %v1715
    %v1756 = vunpack.c.l.b16 %v1716
    %v1757 = vunpack.c.l.b16 %v1717
    %v1758 = vunpack.c.l.b16 %v1718
    %v1759 = vpack.c.b16 %v1744, %v1743
    %v1760 = vpack.c.b16 %v1746, %v1745
    %v1761 = vpack.c.b16 %v1748, %v1747
    %v1762 = vpack.c.b16 %v1750, %v1749
    %v1763 = vpack.c.b16 %v1752, %v1751
    %v1764 = vpack.c.b16 %v1754, %v1753
    %v1765 = vpack.c.b16 %v1756, %v1755
    %v1766 = vpack.c.b16 %v1758, %v1757
    %1775 = vmatprep.subr.bf16.mxu0 0
    %1776 = vmatpush1.bf16.msra.mxu0 %v1759
    %1777 = vmatprep.subr.bf16.mxu0 0
    %1778 = vmatpush1.bf16.msra.mxu0 %v1760
    %1779 = vmatprep.subr.bf16.mxu0 0
    %1780 = vmatpush1.bf16.msra.mxu0 %v1761
    %1781 = vmatprep.subr.bf16.mxu0 0
    %1782 = vmatpush1.bf16.msra.mxu0 %v1762
    %1783 = vmatprep.subr.bf16.mxu0 0
    %1784 = vmatpush1.bf16.msra.mxu0 %v1763
    %1785 = vmatprep.subr.bf16.mxu0 0
    %1786 = vmatpush1.bf16.msra.mxu0 %v1764
    %1787 = vmatprep.subr.bf16.mxu0 0
    %1788 = vmatpush1.bf16.msra.mxu0 %v1765
    %1789 = vmatprep.subr.bf16.mxu0 0
    %1790 = vmatpush1.bf16.msra.mxu0 %v1766
    %1791 = vmatprep.subr.bf16.mxu0 0
    %1792 = vmatpush1.bf16.msra.mxu0 0
    %1793 = vmatprep.subr.bf16.mxu0 0
    %1794 = vmatpush1.bf16.msra.mxu0 0
    %1795 = vmatprep.subr.bf16.mxu0 0
    %1796 = vmatpush1.bf16.msra.mxu0 0
    %1797 = vmatprep.subr.bf16.mxu0 0
    %1798 = vmatpush1.bf16.msra.mxu0 0
    %1799 = vmatprep.subr.bf16.mxu0 0
    %1800 = vmatpush1.bf16.msra.mxu0 0
    %1801 = vmatprep.subr.bf16.mxu0 0
    %1802 = vmatpush1.bf16.msra.mxu0 0
    %1803 = vmatprep.subr.bf16.mxu0 0
    %1804 = vmatpush1.bf16.msra.mxu0 0
    %1805 = vmatprep.subr.bf16.mxu0 0
    %1806 = vmatpush1.bf16.msra.mxu0 0
    %1807 = vmatprep.mubr.bf16.mxu0 0
    %1808 = vmatmul.mubr.bf16.gmra.mrb[0].mxu0 %v1701
    %v1809 = vpop.f32.mrb[0].mxu0
    %v1810 = vadd.f32 %v1725, %v1809
    %v1811 = vpop.f32.mrb[0].mxu0
    %v1812 = vpop.f32.mrb[0].mxu0
    %v1813 = vadd.f32 %v1725, %v1812
    %v1814 = vpop.f32.mrb[0].mxu0
    %1815 = vdwg.mxu0
    %v1816 = vadd.f32 %v1611, %v1810
    %v1817 = vadd.f32 %v1612, %v1813
    %s1818 = scalar_lea.vmem [#allocation8], 17
    %v1819 = vld [vmem:[%s1818] sm:$0x1]
    %s1820 = scalar_lea.vmem [#allocation8], 18
    %v1821 = vld [vmem:[%s1820] sm:$0x1]
    %v1822 = vsel %vm271, %v1816, 0.0
    %1823 = vadd.xlane.f32.xlu0 %v1822
    %v1824 = vpop.xlane.xlu0 %1823
    %v1825 = vsel %vm271, %v1817, 0.0
    %1826 = vadd.xlane.f32.xlu0 %v1825
    %v1827 = vpop.xlane.xlu0 %1826
    %v1828 = vmul.f32 %v1824, %v761
    %v1829 = vmul.f32 %v1827, %v761
    %v1830 = vsub.f32 %v1816, %v1828
    %v1831 = vsub.f32 %v1817, %v1829
    %v1832 = vmul.f32 %v1830, %v1830
    %v1833 = vmul.f32 %v1831, %v1831
    %v1834 = vsel %vm271, %v1832, 0.0
    %1835 = vadd.xlane.f32.xlu0 %v1834
    %v1836 = vpop.xlane.xlu0 %1835
    %v1837 = vsel %vm271, %v1833, 0.0
    %1838 = vadd.xlane.f32.xlu0 %v1837
    %v1839 = vpop.xlane.xlu0 %1838
    %v1840 = vmul.f32 %v1836, %v761
    %v1841 = vmul.f32 %v1839, %v761
    %v1842 = vadd.f32 %v1840, 1e-05
    %v1843 = vadd.f32 %v1841, 1e-05
    %v1844 = vrsqrt.pop %v1842
    %v1845 = vrsqrt.pop %v1843
    %v1846 = vmul.f32 %v1830, %v1844
    %v1847 = vmul.f32 %v1831, %v1845
    %v1849 = vlaneseq
    %v1850 = vshrl.u32 %v1849, 7
    %v1851 = vsub.s32 0, %v1850
    %v1852 = vrot.slane %v1819, %v1851
    %v1854 = vmul.f32 %v1846, %v1852
    %v1855 = vmul.f32 %v1847, %v1852
    %v1857 = vlaneseq
    %v1858 = vshrl.u32 %v1857, 7
    %v1859 = vsub.s32 0, %v1858
    %v1860 = vrot.slane %v1821, %v1859
    %v1862 = vadd.f32 %v1854, %v1860
    %v1863 = vadd.f32 %v1855, %v1860
    %v1864 = vld [vmem:[#allocation14] sm:$0x1]
    %v1865 = vpack.c.bf16 %v1863, %v1862
    %vm1866 = vcmask 130048
    %v1868 = vsel %vm1866, %v1864, 0
    %1870 = vmatprep.subr.bf16.mxu0 0
    %1871 = vmatpush1.bf16.msra.mxu0 %v1865
    %1872 = vmatprep.subr.bf16.mxu0 0
    %1873 = vmatpush1.bf16.msra.mxu0 0
    %1874 = vmatprep.subr.bf16.mxu0 0
    %1875 = vmatpush1.bf16.msra.mxu0 0
    %1876 = vmatprep.subr.bf16.mxu0 0
    %1877 = vmatpush1.bf16.msra.mxu0 0
    %1878 = vmatprep.subr.bf16.mxu0 0
    %1879 = vmatpush1.bf16.msra.mxu0 0
    %1880 = vmatprep.subr.bf16.mxu0 0
    %1881 = vmatpush1.bf16.msra.mxu0 0
    %1882 = vmatprep.subr.bf16.mxu0 0
    %1883 = vmatpush1.bf16.msra.mxu0 0
    %1884 = vmatprep.subr.bf16.mxu0 0
    %1885 = vmatpush1.bf16.msra.mxu0 0
    %1886 = vmatprep.subr.bf16.mxu0 0
    %1887 = vmatpush1.bf16.msra.mxu0 0
    %1888 = vmatprep.subr.bf16.mxu0 0
    %1889 = vmatpush1.bf16.msra.mxu0 0
    %1890 = vmatprep.subr.bf16.mxu0 0
    %1891 = vmatpush1.bf16.msra.mxu0 0
    %1892 = vmatprep.subr.bf16.mxu0 0
    %1893 = vmatpush1.bf16.msra.mxu0 0
    %1894 = vmatprep.subr.bf16.mxu0 0
    %1895 = vmatpush1.bf16.msra.mxu0 0
    %1896 = vmatprep.subr.bf16.mxu0 0
    %1897 = vmatpush1.bf16.msra.mxu0 0
    %1898 = vmatprep.subr.bf16.mxu0 0
    %1899 = vmatpush1.bf16.msra.mxu0 0
    %1900 = vmatprep.subr.bf16.mxu0 0
    %1901 = vmatpush1.bf16.msra.mxu0 0
    %1902 = vmatprep.mubr.bf16.mxu0 0
    %1903 = vmatmul.mubr.bf16.gmra.mrb[0].mxu0 %v1868
    %v1904 = vpop.f32.mrb[0].mxu0
    %v1905 = vadd.f32 0.0, %v1904
    %v1906 = vpop.f32.mrb[0].mxu0
    %v1907 = vpop.f32.mrb[0].mxu0
    %v1908 = vpop.f32.mrb[0].mxu0
    %1909 = vdwg.mxu0
    %v1910 = vpack.c.bf16 %v1905, %v1905
    %v1911 = vld [vmem:[%s6] sm:$0xf]
    %v1912 = vld [vmem:[%s6 + $0x4] sm:$0xf]
    %v1913 = vld [vmem:[%s6 + $0x8] sm:$0xf]
    %v1914 = vld [vmem:[%s6 + $0xc] sm:$0xf]
    %v1915 = vld [vmem:[%s6 + $0x10] sm:$0xf]
    %v1916 = vld [vmem:[%s6 + $0x14] sm:$0xf]
    %v1917 = vld [vmem:[%s6 + $0x18] sm:$0xf]
    %v1918 = vld [vmem:[%s6 + $0x1c] sm:$0xf]
    %s1919 = scalar_lea.vmem %s9, 2
    %v1920 = vld [vmem:[%s1919] sm:$0x1]
    %v1922 = vlaneseq
    %v1923 = vshrl.u32 %v1922, 7
    %v1924 = vsub.s32 0, %v1923
    %v1925 = vrot.slane %v1920, %v1924
    %v1935 = vunpack.c.l.b16 %v1911
    %v1936 = vunpack.c.l.b16 %v1912
    %v1937 = vunpack.c.l.b16 %v1913
    %v1938 = vunpack.c.l.b16 %v1914
    %v1939 = vunpack.c.l.b16 %v1915
    %v1940 = vunpack.c.l.b16 %v1916
    %v1941 = vunpack.c.l.b16 %v1917
    %v1942 = vunpack.c.l.b16 %v1918
    %v1943 = vpack.c.b16 %v1936, %v1935
    %v1944 = vpack.c.b16 %v1938, %v1937
    %v1945 = vpack.c.b16 %v1940, %v1939
    %v1946 = vpack.c.b16 %v1942, %v1941
    %v1952 = vsel %vm271, %v1910, 0
    %1954 = vmatprep.subr.bf16.mxu0 0
    %1955 = vmatpush1.bf16.msra.mxu0 %v1943
    %1956 = vmatprep.subr.bf16.mxu0 0
    %1957 = vmatpush1.bf16.msra.mxu0 %v1944
    %1958 = vmatprep.subr.bf16.mxu0 0
    %1959 = vmatpush1.bf16.msra.mxu0 %v1945
    %1960 = vmatprep.subr.bf16.mxu0 0
    %1961 = vmatpush1.bf16.msra.mxu0 %v1946
    %1962 = vmatprep.subr.bf16.mxu0 0
    %1963 = vmatpush1.bf16.msra.mxu0 0
    %1964 = vmatprep.subr.bf16.mxu0 0
    %1965 = vmatpush1.bf16.msra.mxu0 0
    %1966 = vmatprep.subr.bf16.mxu0 0
    %1967 = vmatpush1.bf16.msra.mxu0 0
    %1968 = vmatprep.subr.bf16.mxu0 0
    %1969 = vmatpush1.bf16.msra.mxu0 0
    %1970 = vmatprep.subr.bf16.mxu0 0
    %1971 = vmatpush1.bf16.msra.mxu0 0
    %1972 = vmatprep.subr.bf16.mxu0 0
    %1973 = vmatpush1.bf16.msra.mxu0 0
    %1974 = vmatprep.subr.bf16.mxu0 0
    %1975 = vmatpush1.bf16.msra.mxu0 0
    %1976 = vmatprep.subr.bf16.mxu0 0
    %1977 = vmatpush1.bf16.msra.mxu0 0
    %1978 = vmatprep.subr.bf16.mxu0 0
    %1979 = vmatpush1.bf16.msra.mxu0 0
    %1980 = vmatprep.subr.bf16.mxu0 0
    %1981 = vmatpush1.bf16.msra.mxu0 0
    %1982 = vmatprep.subr.bf16.mxu0 0
    %1983 = vmatpush1.bf16.msra.mxu0 0
    %1984 = vmatprep.subr.bf16.mxu0 0
    %1985 = vmatpush1.bf16.msra.mxu0 0
    %1986 = vmatprep.mubr.bf16.mxu0 0
    %1987 = vmatmul.mubr.bf16.gmra.mrb[0].mxu0 %v1952
    %v1988 = vpop.f32.mrb[0].mxu0
    %v1989 = vadd.f32 %v1925, %v1988
    %v1990 = vpop.f32.mrb[0].mxu0
    %v1991 = vpop.f32.mrb[0].mxu0
    %v1992 = vpop.f32.mrb[0].mxu0
    %1993 = vdwg.mxu0
    %v1994 = vmax.f32 %v1989, 0.0
    %v1995 = vpack.c.bf16 %v1994, %v1994
    %v1996 = vld [vmem:[%s7] sm:$0xf]
    %v1997 = vld [vmem:[%s7 + $0x4] sm:$0xf]
    %v1998 = vld [vmem:[%s7 + $0x8] sm:$0xf]
    %v1999 = vld [vmem:[%s7 + $0xc] sm:$0xf]
    %v2000 = vld [vmem:[%s7 + $0x10] sm:$0xf]
    %v2001 = vld [vmem:[%s7 + $0x14] sm:$0xf]
    %v2002 = vld [vmem:[%s7 + $0x18] sm:$0xf]
    %v2003 = vld [vmem:[%s7 + $0x1c] sm:$0xf]
    %v2004 = vld [vmem:[%s7 + $0x20] sm:$0xf]
    %v2005 = vld [vmem:[%s7 + $0x24] sm:$0xf]
    %v2006 = vld [vmem:[%s7 + $0x28] sm:$0xf]
    %v2007 = vld [vmem:[%s7 + $0x2c] sm:$0xf]
    %v2008 = vld [vmem:[%s7 + $0x30] sm:$0xf]
    %v2009 = vld [vmem:[%s7 + $0x34] sm:$0xf]
    %v2010 = vld [vmem:[%s7 + $0x38] sm:$0xf]
    %v2011 = vld [vmem:[%s7 + $0x3c] sm:$0xf]
    %v2012 = vld [vmem:[#allocation10] sm:$0x1]
    %v2014 = vlaneseq
    %v2015 = vshrl.u32 %v2014, 7
    %v2016 = vsub.s32 0, %v2015
    %v2017 = vrot.slane %v2012, %v2016
    %v2035 = vunpack.c.l.b16 %v1996
    %v2036 = vunpack.c.l.b16 %v1997
    %v2037 = vunpack.c.l.b16 %v1998
    %v2038 = vunpack.c.l.b16 %v1999
    %v2039 = vunpack.c.l.b16 %v2000
    %v2040 = vunpack.c.l.b16 %v2001
    %v2041 = vunpack.c.l.b16 %v2002
    %v2042 = vunpack.c.l.b16 %v2003
    %v2043 = vunpack.c.l.b16 %v2004
    %v2044 = vunpack.c.l.b16 %v2005
    %v2045 = vunpack.c.l.b16 %v2006
    %v2046 = vunpack.c.l.b16 %v2007
    %v2047 = vunpack.c.l.b16 %v2008
    %v2048 = vunpack.c.l.b16 %v2009
    %v2049 = vunpack.c.l.b16 %v2010
    %v2050 = vunpack.c.l.b16 %v2011
    %v2051 = vpack.c.b16 %v2036, %v2035
    %v2052 = vpack.c.b16 %v2038, %v2037
    %v2053 = vpack.c.b16 %v2040, %v2039
    %v2054 = vpack.c.b16 %v2042, %v2041
    %v2055 = vpack.c.b16 %v2044, %v2043
    %v2056 = vpack.c.b16 %v2046, %v2045
    %v2057 = vpack.c.b16 %v2048, %v2047
    %v2058 = vpack.c.b16 %v2050, %v2049
    %2067 = vmatprep.subr.bf16.mxu0 0
    %2068 = vmatpush1.bf16.msra.mxu0 %v2051
    %2069 = vmatprep.subr.bf16.mxu0 0
    %2070 = vmatpush1.bf16.msra.mxu0 %v2052
    %2071 = vmatprep.subr.bf16.mxu0 0
    %2072 = vmatpush1.bf16.msra.mxu0 %v2053
    %2073 = vmatprep.subr.bf16.mxu0 0
    %2074 = vmatpush1.bf16.msra.mxu0 %v2054
    %2075 = vmatprep.subr.bf16.mxu0 0
    %2076 = vmatpush1.bf16.msra.mxu0 %v2055
    %2077 = vmatprep.subr.bf16.mxu0 0
    %2078 = vmatpush1.bf16.msra.mxu0 %v2056
    %2079 = vmatprep.subr.bf16.mxu0 0
    %2080 = vmatpush1.bf16.msra.mxu0 %v2057
    %2081 = vmatprep.subr.bf16.mxu0 0
    %2082 = vmatpush1.bf16.msra.mxu0 %v2058
    %2083 = vmatprep.subr.bf16.mxu0 0
    %2084 = vmatpush1.bf16.msra.mxu0 0
    %2085 = vmatprep.subr.bf16.mxu0 0
    %2086 = vmatpush1.bf16.msra.mxu0 0
    %2087 = vmatprep.subr.bf16.mxu0 0
    %2088 = vmatpush1.bf16.msra.mxu0 0
    %2089 = vmatprep.subr.bf16.mxu0 0
    %2090 = vmatpush1.bf16.msra.mxu0 0
    %2091 = vmatprep.subr.bf16.mxu0 0
    %2092 = vmatpush1.bf16.msra.mxu0 0
    %2093 = vmatprep.subr.bf16.mxu0 0
    %2094 = vmatpush1.bf16.msra.mxu0 0
    %2095 = vmatprep.subr.bf16.mxu0 0
    %2096 = vmatpush1.bf16.msra.mxu0 0
    %2097 = vmatprep.subr.bf16.mxu0 0
    %2098 = vmatpush1.bf16.msra.mxu0 0
    %2099 = vmatprep.mubr.bf16.mxu0 0
    %2100 = vmatmul.mubr.bf16.gmra.mrb[0].mxu0 %v1995
    %v2101 = vpop.f32.mrb[0].mxu0
    %v2102 = vadd.f32 %v2017, %v2101
    %v2103 = vpop.f32.mrb[0].mxu0
    %v2104 = vpop.f32.mrb[0].mxu0
    %v2105 = vpop.f32.mrb[0].mxu0
    %2106 = vdwg.mxu0
    %vm2107 = vcmask 25600
    %2108 = vst.msk [vmem:[#allocation16] sm:$0x3] %vm2107, %v2102
    // Predicated region
    $region90: #{transformer_forward.1} parent=1 // pred_check
      _
    $region91: #{transformer_forward.1} parent=1 // pred_check_branch
      %2110 = sbr.rel (0) target = $region93
    $region92: #{transformer_forward.1} parent=1 // pred_region
      %s2112 = ssub.s32 32, 32
      %2113 = vsyncadd [#allocation4], %s2112
      %s2115 = sshll.u32 [#allocation16], 4
      %s2116 = int_to_ptr.vmem [resolvable:$true] %s2115
      %2118 = dma.vmem_to_hbm [thread:$0]  %s2116, 32, %s14, [#allocation4]
    $region93: #{transformer_forward.1} parent=1 // pred_fallthru
      _
    // Predicated region
    $region94: #{transformer_forward.1} parent=1 // pred_check
      _
    $region95: #{transformer_forward.1} parent=1 // pred_check_branch
      %2120 = sbr.rel (0) target = $region97
    $region96: #{transformer_forward.1} parent=1 // pred_region
      %2121 = dma.done [#allocation4], 32
    $region97: #{transformer_forward.1} parent=1 // pred_fallthru
      _
    %2122 = vsyncpa [#allocation3], 1
    %2123 = vsyncpa [#allocation6], 1
    %2124 = vsyncpa [#allocation9], 1
    %2125 = vsyncpa [#allocation12], 1
    %2126 = vsyncpa [#allocation15], 1
    %2127 = vsyncpa [#allocation4], 1

</llo_original>
